<compile_context>
chip_gen: v6e
topology: v6e:2x2x1
jax: 0.10.0
libtpu: 0.0.40
codegen_flags: <defaults>
</compile_context>

<pallas_src>
import jax
import jax.numpy as jnp
from jax.experimental import pallas as pl
from jax.experimental.pallas import tpu as pltpu

_MXU_TILE = 256
_DEFAULT_SCOPED_VMEM_BYTES = 14 * (1 << 20)  # stay below v5e's 16 MiB default


def _round_up(x, m):
    return ((x + m - 1) // m) * m


def _mlp_kernel(x_ref,
                w1_ref, b1_ref,
                w2_ref, b2_ref,
                w3_ref, b3_ref,
                w4_ref, b4_ref,
                o_ref):
    # x arrives in its producer dtype (f32); cast to bf16 per tile on the VPU
    # so the wrapper never runs a standalone HBM-bound cast pass.
    x = x_ref[...].astype(jnp.bfloat16)

    # Layers 1-3: Linear + ReLU. bf16 MXU operands, f32 accumulation + f32 bias
    # add, then ReLU on the bf16 value (max(cast(h),0) == cast(max(h,0))).
    h = jnp.dot(x, w1_ref[...], preferred_element_type=jnp.float32) + b1_ref[...]
    h = jnp.maximum(h.astype(jnp.bfloat16), 0.0)

    h = jnp.dot(h, w2_ref[...], preferred_element_type=jnp.float32) + b2_ref[...]
    h = jnp.maximum(h.astype(jnp.bfloat16), 0.0)

    h = jnp.dot(h, w3_ref[...], preferred_element_type=jnp.float32) + b3_ref[...]
    h = jnp.maximum(h.astype(jnp.bfloat16), 0.0)

    # Layer 4: Linear only (no activation); keep f32 accumulation, cast to the
    # requested output dtype on store.
    out = jnp.dot(h, w4_ref[...], preferred_element_type=jnp.float32) + b4_ref[...]
    o_ref[...] = out.astype(o_ref.dtype)


def _pick_tm(batch, tm):
    """Batch tile: full batch for small B; otherwise an MXU-friendly tile that
    guarantees >= 2 grid steps so v7x's two TensorCores both get work."""
    if batch <= _MXU_TILE:
        # One tile covering the whole batch; block dim == array dim satisfies
        # the (8,128) block rule even for tiny batches.
        return batch
    half = _round_up(pl.cdiv(batch, 2), _MXU_TILE)
    return max(_MXU_TILE, min(tm, half))


def _estimate_vmem_bytes(tm, input_dim, out_dim, out_itemsize):
    x_tiles = 2 * tm * input_dim * 4                      # f32 x, double-buffered
    o_tiles = 2 * tm * out_dim * out_itemsize             # output, double-buffered
    w_bytes = (input_dim * 256 + 2 * 256 * 256 + 256 * out_dim) * 2   # bf16, 1-buffered
    b_bytes = (3 * 256 + out_dim) * 4
    interm = tm * input_dim * 2 + 4 * tm * 256 * 4        # bf16 x copy + f32 temporaries
    return x_tiles + o_tiles + w_bytes + b_bytes + interm


def simple_4layer_mlp(x_nchw, params, *, tm=512, out_dtype=jnp.float32):
    """Fused forward pass of Simple4LayerMLP.

    x_nchw : (B, C, H, W), any float dtype (flattened row-major like torch's
             .view(B, -1)); NOT pre-cast -- the kernel casts per tile.
    params : dict with w1..w4 of shape (in, out) and b1..b4 of shape (1, out).
             Pass the output of `prepare_params` so weights are bf16 masters
             (avoids a per-call f32->bf16 HBM pass).
    out_dtype : f32 by default (matches torch); use jnp.bfloat16 to halve the
             output writeback if downstream consumes bf16.
    """
    B = x_nchw.shape[0]
    x = x_nchw.reshape(B, -1)            # torch: xb.view(xb.size(0), -1); keep dtype
    input_dim = x.shape[1]

    # bf16 MXU operands (no-op if prepare_params already cast them); biases stay
    # f32 and are added after the f32 MXU accumulation.
    w = [params[f"w{i}"].astype(jnp.bfloat16) for i in range(1, 5)]
    b = [params[f"b{i}"].astype(jnp.float32) for i in range(1, 5)]
    out_dim = w[3].shape[1]

    tm = max(_MXU_TILE, _round_up(int(tm), _MXU_TILE))
    TM = _pick_tm(B, tm)
    grid = (pl.cdiv(B, TM),)

    # x / out march along the batch grid (double-buffered by Pallas); weights
    # and biases have a constant block index -> resident in VMEM, and single-
    # buffered since their block never changes.
    x_spec = pl.BlockSpec((TM, input_dim), lambda i: (i, 0))
    out_spec = pl.BlockSpec((TM, out_dim), lambda i: (i, 0))

    def resident(arr):
        return pl.BlockSpec(arr.shape, lambda i: (0, 0),
                            pipeline_mode=pl.Buffered(1))

    compiler_kwargs = dict(dimension_semantics=("parallel",))
    est = _estimate_vmem_bytes(TM, input_dim, out_dim, jnp.dtype(out_dtype).itemsize)
    if est > _DEFAULT_SCOPED_VMEM_BYTES:
        # Keep large TM usable on v5e's 16 MiB default scoped VMEM; stay under
        # v7x's 64 MiB physical VMEM.
        compiler_kwargs["vmem_limit_bytes"] = int(min(est * 1.25, 60 * (1 << 20)))

    return pl.pallas_call(
        _mlp_kernel,
        out_shape=jax.ShapeDtypeStruct((B, out_dim), out_dtype),
        grid=grid,
        in_specs=[
            x_spec,
            resident(w[0]), resident(b[0]),
            resident(w[1]), resident(b[1]),
            resident(w[2]), resident(b[2]),
            resident(w[3]), resident(b[3]),
        ],
        out_specs=out_spec,
        compiler_params=pltpu.CompilerParams(**compiler_kwargs),
    )(x, w[0], b[0], w[1], b[1], w[2], b[2], w[3], b[3])


def prepare_params(params_f32):
    """Cast weights to bf16 masters ONCE (serving-style calls shouldn't pay a
    per-call f32->bf16 weight conversion); biases stay f32 with shape (1, out)."""
    prepared = {}
    for i in range(1, 5):
        prepared[f"w{i}"] = params_f32[f"w{i}"].astype(jnp.bfloat16)
        prepared[f"b{i}"] = params_f32[f"b{i}"].astype(jnp.float32).reshape(1, -1)
    return prepared


def init_params(key, input_dim, dim=128, dtype=jnp.float32):
    """Deterministic init matching nn.Linear shapes (stored as (in, out))."""
    dims = [(input_dim, 256), (256, 256), (256, 256), (256, dim)]
    params = {}
    for i, (fan_in, fan_out) in enumerate(dims, start=1):
        key, kw, kb = jax.random.split(key, 3)
        bound = 1.0 / (fan_in ** 0.5)  # torch nn.Linear default uniform bound
        params[f"w{i}"] = jax.random.uniform(
            kw, (fan_in, fan_out), dtype, minval=-bound, maxval=bound)
        params[f"b{i}"] = jax.random.uniform(
            kb, (1, fan_out), dtype, minval=-bound, maxval=bound)
    return params


def _reference_bf16(x_nchw, params_f32):
    """Same math as the kernel (bf16 MXU operands, f32 accumulation, bf16 ReLU)."""
    x = x_nchw.reshape(x_nchw.shape[0], -1).astype(jnp.bfloat16)

    def layer(h, w, b, relu):
        y = jnp.dot(h, w.astype(jnp.bfloat16),
                    preferred_element_type=jnp.float32) + b.astype(jnp.float32)
        if relu:
            y = jnp.maximum(y.astype(jnp.bfloat16), 0.0)
        return y

    h = layer(x, params_f32["w1"], params_f32["b1"], True)
    h = layer(h, params_f32["w2"], params_f32["b2"], True)
    h = layer(h, params_f32["w3"], params_f32["b3"], True)
    return layer(h, params_f32["w4"], params_f32["b4"], False)


def _reference_f32(x_nchw, params_f32):
    x = x_nchw.reshape(x_nchw.shape[0], -1)
    h = jnp.maximum(x @ params_f32["w1"] + params_f32["b1"], 0.0)
    h = jnp.maximum(h @ params_f32["w2"] + params_f32["b2"], 0.0)
    h = jnp.maximum(h @ params_f32["w3"] + params_f32["b3"], 0.0)
    return h @ params_f32["w4"] + params_f32["b4"]


if __name__ == "__main__":
    key = jax.random.PRNGKey(0)
    k_x, k_x2, k_p = jax.random.split(key, 3)

    # Small NCHW input: batch=2, channels=4, spatial=16 -> input_dim = 1024.
    B, C, H, W = 2, 4, 16, 16
    input_dim = C * H * W
    dim = 128

    x = jax.random.normal(k_x, (B, C, H, W), jnp.float32)
    params_f32 = init_params(k_p, input_dim, dim)
    params = prepare_params(params_f32)          # bf16 weight masters, cast once

    out = simple_4layer_mlp(x, params)
    out = jax.block_until_ready(out)
    assert out.shape == (B, dim), out.shape
    assert out.dtype == jnp.float32, out.dtype

    # Tight check vs a reference using identical bf16/f32-accum math.
    ref_bf16 = _reference_bf16(x, params_f32)
    assert jnp.allclose(out, ref_bf16, atol=1e-2, rtol=1e-2), "mismatch vs bf16 reference"

    # Loose sanity check vs the pure-f32 torch-equivalent math (bf16 operands
    # intentionally deviate slightly from the f32 reference).
    ref_f32 = _reference_f32(x, params_f32)
    assert jnp.allclose(out, ref_f32, atol=1e-1, rtol=1e-1), "mismatch vs f32 reference"

    # Exercise the multi-tile path (grid=2, partial last tile, masked writes).
    B2 = 272
    x2 = jax.random.normal(k_x2, (B2, C, H, W), jnp.float32)
    out2 = jax.block_until_ready(simple_4layer_mlp(x2, params))
    assert out2.shape == (B2, dim), out2.shape
    ref2 = _reference_bf16(x2, params_f32)
    assert jnp.allclose(out2, ref2, atol=1e-2, rtol=1e-2), "mismatch on multi-tile batch"

    print("KERNEL_OK")
</pallas_src>

<mosaic_0001>
module attributes {stable_mosaic.version = 11 : i64} {
  func.func @_mlp_kernel(%arg0: i32, %arg1: memref<2x1024xf32, #tpu.memory_space<vmem>>, %arg2: memref<1024x256xbf16, #tpu.memory_space<vmem>>, %arg3: memref<1x256xf32, #tpu.memory_space<vmem>>, %arg4: memref<256x256xbf16, #tpu.memory_space<vmem>>, %arg5: memref<1x256xf32, #tpu.memory_space<vmem>>, %arg6: memref<256x256xbf16, #tpu.memory_space<vmem>>, %arg7: memref<1x256xf32, #tpu.memory_space<vmem>>, %arg8: memref<256x128xbf16, #tpu.memory_space<vmem>>, %arg9: memref<1x128xf32, #tpu.memory_space<vmem>>, %arg10: memref<2x128xf32, #tpu.memory_space<vmem>>) attributes {dimension_semantics = [#tpu.dimension_semantics<parallel>], iteration_bounds = array<i64: 1>, scalar_prefetch = 0 : i64, scratch_operands = 0 : i64, tpu.core_type = #tpu.core_type<tc>, window_params = [{transform_indices = @transform_0, window_bounds = array<i64: 2, 1024>}, {pipeline_mode = #tpu.pipeline_mode<synchronous>, transform_indices = @transform_1, window_bounds = array<i64: 1024, 256>}, {pipeline_mode = #tpu.pipeline_mode<synchronous>, transform_indices = @transform_2, window_bounds = array<i64: 1, 256>}, {pipeline_mode = #tpu.pipeline_mode<synchronous>, transform_indices = @transform_3, window_bounds = array<i64: 256, 256>}, {pipeline_mode = #tpu.pipeline_mode<synchronous>, transform_indices = @transform_4, window_bounds = array<i64: 1, 256>}, {pipeline_mode = #tpu.pipeline_mode<synchronous>, transform_indices = @transform_5, window_bounds = array<i64: 256, 256>}, {pipeline_mode = #tpu.pipeline_mode<synchronous>, transform_indices = @transform_6, window_bounds = array<i64: 1, 256>}, {pipeline_mode = #tpu.pipeline_mode<synchronous>, transform_indices = @transform_7, window_bounds = array<i64: 256, 128>}, {pipeline_mode = #tpu.pipeline_mode<synchronous>, transform_indices = @transform_8, window_bounds = array<i64: 1, 128>}, {transform_indices = @transform_9, window_bounds = array<i64: 2, 128>}]} {
    %c0 = arith.constant 0 : index
    %c0_0 = arith.constant 0 : index
    %0 = vector.load %arg1[%c0, %c0_0] : memref<2x1024xf32, #tpu.memory_space<vmem>>, vector<2x1024xf32>
    %1 = arith.truncf %0 : vector<2x1024xf32> to vector<2x1024xbf16>
    %c0_1 = arith.constant 0 : index
    %c0_2 = arith.constant 0 : index
    %2 = vector.load %arg2[%c0_1, %c0_2] : memref<1024x256xbf16, #tpu.memory_space<vmem>>, vector<1024x256xbf16>
    %cst = arith.constant dense<0.000000e+00> : vector<2x256xf32>
    %3 = tpu.matmul %1, %2, %cst {dimension_numbers = #tpu.dot_dimension_numbers<[1], [0], [0], [1], [0, 0, 1, 1], [], []>} : vector<2x1024xbf16>, vector<1024x256xbf16>, vector<2x256xf32> -> vector<2x256xf32>
    %c0_3 = arith.constant 0 : index
    %c0_4 = arith.constant 0 : index
    %4 = vector.load %arg3[%c0_3, %c0_4] : memref<1x256xf32, #tpu.memory_space<vmem>>, vector<1x256xf32>
    %5 = vector.broadcast %4 : vector<1x256xf32> to vector<2x256xf32>
    %6 = arith.addf %3, %5 : vector<2x256xf32>
    %7 = arith.truncf %6 : vector<2x256xf32> to vector<2x256xbf16>
    %cst_5 = arith.constant 0.000000e+00 : bf16
    %8 = vector.broadcast %cst_5 : bf16 to vector<2x256xbf16>
    %9 = arith.maximumf %7, %8 : vector<2x256xbf16>
    %c0_6 = arith.constant 0 : index
    %c0_7 = arith.constant 0 : index
    %10 = vector.load %arg4[%c0_6, %c0_7] : memref<256x256xbf16, #tpu.memory_space<vmem>>, vector<256x256xbf16>
    %cst_8 = arith.constant dense<0.000000e+00> : vector<2x256xf32>
    %11 = tpu.matmul %9, %10, %cst_8 {dimension_numbers = #tpu.dot_dimension_numbers<[1], [0], [0], [1], [0, 0, 1, 1], [], []>} : vector<2x256xbf16>, vector<256x256xbf16>, vector<2x256xf32> -> vector<2x256xf32>
    %c0_9 = arith.constant 0 : index
    %c0_10 = arith.constant 0 : index
    %12 = vector.load %arg5[%c0_9, %c0_10] : memref<1x256xf32, #tpu.memory_space<vmem>>, vector<1x256xf32>
    %13 = vector.broadcast %12 : vector<1x256xf32> to vector<2x256xf32>
    %14 = arith.addf %11, %13 : vector<2x256xf32>
    %15 = arith.truncf %14 : vector<2x256xf32> to vector<2x256xbf16>
    %cst_11 = arith.constant 0.000000e+00 : bf16
    %16 = vector.broadcast %cst_11 : bf16 to vector<2x256xbf16>
    %17 = arith.maximumf %15, %16 : vector<2x256xbf16>
    %c0_12 = arith.constant 0 : index
    %c0_13 = arith.constant 0 : index
    %18 = vector.load %arg6[%c0_12, %c0_13] : memref<256x256xbf16, #tpu.memory_space<vmem>>, vector<256x256xbf16>
    %cst_14 = arith.constant dense<0.000000e+00> : vector<2x256xf32>
    %19 = tpu.matmul %17, %18, %cst_14 {dimension_numbers = #tpu.dot_dimension_numbers<[1], [0], [0], [1], [0, 0, 1, 1], [], []>} : vector<2x256xbf16>, vector<256x256xbf16>, vector<2x256xf32> -> vector<2x256xf32>
    %c0_15 = arith.constant 0 : index
    %c0_16 = arith.constant 0 : index
    %20 = vector.load %arg7[%c0_15, %c0_16] : memref<1x256xf32, #tpu.memory_space<vmem>>, vector<1x256xf32>
    %21 = vector.broadcast %20 : vector<1x256xf32> to vector<2x256xf32>
    %22 = arith.addf %19, %21 : vector<2x256xf32>
    %23 = arith.truncf %22 : vector<2x256xf32> to vector<2x256xbf16>
    %cst_17 = arith.constant 0.000000e+00 : bf16
    %24 = vector.broadcast %cst_17 : bf16 to vector<2x256xbf16>
    %25 = arith.maximumf %23, %24 : vector<2x256xbf16>
    %c0_18 = arith.constant 0 : index
    %c0_19 = arith.constant 0 : index
    %26 = vector.load %arg8[%c0_18, %c0_19] : memref<256x128xbf16, #tpu.memory_space<vmem>>, vector<256x128xbf16>
    %cst_20 = arith.constant dense<0.000000e+00> : vector<2x128xf32>
    %27 = tpu.matmul %25, %26, %cst_20 {dimension_numbers = #tpu.dot_dimension_numbers<[1], [0], [0], [1], [0, 0, 1, 1], [], []>} : vector<2x256xbf16>, vector<256x128xbf16>, vector<2x128xf32> -> vector<2x128xf32>
    %c0_21 = arith.constant 0 : index
    %c0_22 = arith.constant 0 : index
    %28 = vector.load %arg9[%c0_21, %c0_22] : memref<1x128xf32, #tpu.memory_space<vmem>>, vector<1x128xf32>
    %29 = vector.broadcast %28 : vector<1x128xf32> to vector<2x128xf32>
    %30 = arith.addf %27, %29 : vector<2x128xf32>
    %c0_23 = arith.constant 0 : index
    %c0_24 = arith.constant 0 : index
    %31 = vector.load %arg10[%c0_23, %c0_24] : memref<2x128xf32, #tpu.memory_space<vmem>>, vector<2x128xf32>
    tpu.vector_store %arg10[%c0_23, %c0_24], %30 {strides = array<i32>} : memref<2x128xf32, #tpu.memory_space<vmem>>, vector<2x128xf32>,
    return
  }
  func.func @transform_0(%arg0: i32) -> (i32, i32) {
    %c0_i32 = arith.constant 0 : i32
    %c0_i32_0 = arith.constant 0 : i32
    return %arg0, %c0_i32 : i32, i32
  }
  func.func @transform_1(%arg0: i32) -> (i32, i32) {
    %c0_i32 = arith.constant 0 : i32
    %c0_i32_0 = arith.constant 0 : i32
    %c0_i32_1 = arith.constant 0 : i32
    return %c0_i32, %c0_i32_0 : i32, i32
  }
  func.func @transform_2(%arg0: i32) -> (i32, i32) {
    %c0_i32 = arith.constant 0 : i32
    %c0_i32_0 = arith.constant 0 : i32
    %c0_i32_1 = arith.constant 0 : i32
    return %c0_i32, %c0_i32_0 : i32, i32
  }
  func.func @transform_3(%arg0: i32) -> (i32, i32) {
    %c0_i32 = arith.constant 0 : i32
    %c0_i32_0 = arith.constant 0 : i32
    %c0_i32_1 = arith.constant 0 : i32
    return %c0_i32, %c0_i32_0 : i32, i32
  }
  func.func @transform_4(%arg0: i32) -> (i32, i32) {
    %c0_i32 = arith.constant 0 : i32
    %c0_i32_0 = arith.constant 0 : i32
    %c0_i32_1 = arith.constant 0 : i32
    return %c0_i32, %c0_i32_0 : i32, i32
  }
  func.func @transform_5(%arg0: i32) -> (i32, i32) {
    %c0_i32 = arith.constant 0 : i32
    %c0_i32_0 = arith.constant 0 : i32
    %c0_i32_1 = arith.constant 0 : i32
    return %c0_i32, %c0_i32_0 : i32, i32
  }
  func.func @transform_6(%arg0: i32) -> (i32, i32) {
    %c0_i32 = arith.constant 0 : i32
    %c0_i32_0 = arith.constant 0 : i32
    %c0_i32_1 = arith.constant 0 : i32
    return %c0_i32, %c0_i32_0 : i32, i32
  }
  func.func @transform_7(%arg0: i32) -> (i32, i32) {
    %c0_i32 = arith.constant 0 : i32
    %c0_i32_0 = arith.constant 0 : i32
    %c0_i32_1 = arith.constant 0 : i32
    return %c0_i32, %c0_i32_0 : i32, i32
  }
  func.func @transform_8(%arg0: i32) -> (i32, i32) {
    %c0_i32 = arith.constant 0 : i32
    %c0_i32_0 = arith.constant 0 : i32
    %c0_i32_1 = arith.constant 0 : i32
    return %c0_i32, %c0_i32_0 : i32, i32
  }
  func.func @transform_9(%arg0: i32) -> (i32, i32) {
    %c0_i32 = arith.constant 0 : i32
    %c0_i32_0 = arith.constant 0 : i32
    return %arg0, %c0_i32 : i32, i32
  }
}

</mosaic_0001>

<llo_original>
// kernel: tpu_custom_call.1
$region0: #{tpu_custom_call.1}
  #allocation0 [shape = 'u32[]', space=smem, size = 0x4, offset = 0x4, fixed_abs, tag = 'smem constant byte address 0x4 - core index']
  #allocation1 [shape = 'u32[144,128]{1,0:T(1,128)}', space=vmem, size = 0x12000, scoped, tag = 'internal scratch']
  %s0 = inlined_call_operand.hbm [shape: f32[2,1024], index: 0, kind: input, shape index: {}]
  %s1 = inlined_call_operand.hbm [shape: bf16[1024,256], index: 1, kind: input, shape index: {}]
  %s2 = inlined_call_operand.vmem [shape: f32[1,256], index: 2, kind: input, shape index: {}]
  %s3 = inlined_call_operand.hbm [shape: bf16[256,256], index: 3, kind: input, shape index: {}]
  %s4 = inlined_call_operand.vmem [shape: f32[1,256], index: 4, kind: input, shape index: {}]
  %s5 = inlined_call_operand.hbm [shape: bf16[256,256], index: 5, kind: input, shape index: {}]
  %s6 = inlined_call_operand.vmem [shape: f32[1,256], index: 6, kind: input, shape index: {}]
  %s7 = inlined_call_operand.hbm [shape: bf16[256,128], index: 7, kind: input, shape index: {}]
  %s8 = inlined_call_operand.vmem [shape: f32[1,128], index: 8, kind: input, shape index: {}]
  %s9 = inlined_call_operand.hbm [shape: f32[2,128], index: 9, kind: output, shape index: {}]
  %s10 = sld [smem:[#allocation0]]
  $region66: #{tpu_custom_call.1} parent=0
    _
  %s12 = ssub.s32 1, %s10
  %s13 = scalar_select 0, %s12, %s10
  $region1: #{tpu_custom_call.1} parent=0
    #allocation2 [shape = 'u8[8192]{0}', space=vmem, size = 0x2000, scoped, tag = 'input window, operand 0, single buffered']
    #allocation3 [shape = 's32[1]{0}', space=sflag, size = 0x4, scoped, tag = 'scoped memory for tpu_custom_call.1']
    #allocation4 [shape = 's32[1]{0}', space=sflag, size = 0x4, scoped, tag = 'scoped memory for tpu_custom_call.1']
    #allocation5 [shape = 'u8[524288]{0}', space=vmem, size = 0x80000, scoped, tag = 'input window, operand 1, single buffered']
    #allocation6 [shape = 's32[1]{0}', space=sflag, size = 0x4, scoped, tag = 'scoped memory for tpu_custom_call.1']
    #allocation7 [shape = 'u8[131072]{0}', space=vmem, size = 0x20000, scoped, tag = 'input window, operand 3, single buffered']
    #allocation8 [shape = 'u8[131072]{0}', space=vmem, size = 0x20000, scoped, tag = 'input window, operand 5, single buffered']
    #allocation9 [shape = 's32[1]{0}', space=sflag, size = 0x4, scoped, tag = 'scoped memory for tpu_custom_call.1']
    #allocation10 [shape = 'u8[65536]{0}', space=vmem, size = 0x10000, scoped, tag = 'input window, operand 7, single buffered']
    #allocation11 [shape = 'u8[1024]{0}', space=vmem, size = 0x400, scoped, tag = 'output window, operand 0, single buffered']
    %14 = vsyncpa [#allocation3], 0
    %15 = vsyncpa [#allocation6], 0
    %16 = vsyncpa [#allocation9], 0
    %17 = vsyncpa [#allocation4], 0
    // Predicated region
    $region2: #{tpu_custom_call.1} parent=1 // pred_check
      _
    $region3: #{tpu_custom_call.1} parent=1 // pred_check_branch
      %19 = sbr.rel (0) target = $region5
    $region4: #{tpu_custom_call.1} parent=1 // pred_region
      %s21 = ssub.s32 256, 256
      %22 = vsyncadd [#allocation3], %s21
      %s24 = sshll.u32 [#allocation2], 4
      %s25 = int_to_ptr.vmem [resolvable:$true] %s24
      %27 = dma.hbm_to_vmem [thread:$0]  %s0, 256, %s25, [#allocation3]
    $region5: #{tpu_custom_call.1} parent=1 // pred_fallthru
      _
    // Predicated region
    $region6: #{tpu_custom_call.1} parent=1 // pred_check
      _
    $region7: #{tpu_custom_call.1} parent=1 // pred_check_branch
      %29 = sbr.rel (0) target = $region9
    $region8: #{tpu_custom_call.1} parent=1 // pred_region
      %s31 = ssub.s32 16384, 16384
      %32 = vsyncadd [#allocation6], %s31
      %s33 = sshll.u32 [#allocation5], 4
      %s34 = int_to_ptr.vmem [resolvable:$true] %s33
      %39 = dma.hbm_to_vmem [thread:$0]  %s1, 16384, %s34, [#allocation6], 128, 128, 8
    $region9: #{tpu_custom_call.1} parent=1 // pred_fallthru
      _
    // Predicated region
    $region10: #{tpu_custom_call.1} parent=1 // pred_check
      _
    $region11: #{tpu_custom_call.1} parent=1 // pred_check_branch
      %41 = sbr.rel (0) target = $region13
    $region12: #{tpu_custom_call.1} parent=1 // pred_region
      _
    $region13: #{tpu_custom_call.1} parent=1 // pred_fallthru
      _
    // Predicated region
    $region14: #{tpu_custom_call.1} parent=1 // pred_check
      _
    $region15: #{tpu_custom_call.1} parent=1 // pred_check_branch
      %43 = sbr.rel (0) target = $region17
    $region16: #{tpu_custom_call.1} parent=1 // pred_region
      %s45 = ssub.s32 4096, 4096
      %46 = vsyncadd [#allocation6], %s45
      %s47 = sshll.u32 [#allocation7], 4
      %s48 = int_to_ptr.vmem [resolvable:$true] %s47
      %53 = dma.hbm_to_vmem [thread:$0]  %s3, 4096, %s48, [#allocation6], 128, 128, 8
    $region17: #{tpu_custom_call.1} parent=1 // pred_fallthru
      _
    // Predicated region
    $region18: #{tpu_custom_call.1} parent=1 // pred_check
      _
    $region19: #{tpu_custom_call.1} parent=1 // pred_check_branch
      %55 = sbr.rel (0) target = $region21
    $region20: #{tpu_custom_call.1} parent=1 // pred_region
      _
    $region21: #{tpu_custom_call.1} parent=1 // pred_fallthru
      _
    // Predicated region
    $region22: #{tpu_custom_call.1} parent=1 // pred_check
      _
    $region23: #{tpu_custom_call.1} parent=1 // pred_check_branch
      %57 = sbr.rel (0) target = $region25
    $region24: #{tpu_custom_call.1} parent=1 // pred_region
      %s59 = ssub.s32 4096, 4096
      %60 = vsyncadd [#allocation9], %s59
      %s61 = sshll.u32 [#allocation8], 4
      %s62 = int_to_ptr.vmem [resolvable:$true] %s61
      %67 = dma.hbm_to_vmem [thread:$0]  %s5, 4096, %s62, [#allocation9], 128, 128, 8
    $region25: #{tpu_custom_call.1} parent=1 // pred_fallthru
      _
    // Predicated region
    $region26: #{tpu_custom_call.1} parent=1 // pred_check
      _
    $region27: #{tpu_custom_call.1} parent=1 // pred_check_branch
      %69 = sbr.rel (0) target = $region29
    $region28: #{tpu_custom_call.1} parent=1 // pred_region
      _
    $region29: #{tpu_custom_call.1} parent=1 // pred_fallthru
      _
    // Predicated region
    $region30: #{tpu_custom_call.1} parent=1 // pred_check
      _
    $region31: #{tpu_custom_call.1} parent=1 // pred_check_branch
      %71 = sbr.rel (0) target = $region33
    $region32: #{tpu_custom_call.1} parent=1 // pred_region
      %s73 = ssub.s32 2048, 2048
      %74 = vsyncadd [#allocation9], %s73
      %s75 = sshll.u32 [#allocation10], 4
      %s76 = int_to_ptr.vmem [resolvable:$true] %s75
      %81 = dma.hbm_to_vmem [thread:$0]  %s7, 2048, %s76, [#allocation9], 64, 64, 4
    $region33: #{tpu_custom_call.1} parent=1 // pred_fallthru
      _
    // Predicated region
    $region34: #{tpu_custom_call.1} parent=1 // pred_check
      _
    $region35: #{tpu_custom_call.1} parent=1 // pred_check_branch
      %83 = sbr.rel (0) target = $region37
    $region36: #{tpu_custom_call.1} parent=1 // pred_region
      _
    $region37: #{tpu_custom_call.1} parent=1 // pred_fallthru
      _
    // Predicated region
    $region38: #{tpu_custom_call.1} parent=1 // pred_check
      _
    $region39: #{tpu_custom_call.1} parent=1 // pred_check_branch
      %85 = sbr.rel (0) target = $region41
    $region40: #{tpu_custom_call.1} parent=1 // pred_region
      %86 = dma.done [#allocation3], 256
    $region41: #{tpu_custom_call.1} parent=1 // pred_fallthru
      _
    // Predicated region
    $region42: #{tpu_custom_call.1} parent=1 // pred_check
      _
    $region43: #{tpu_custom_call.1} parent=1 // pred_check_branch
      %88 = sbr.rel (0) target = $region45
    $region44: #{tpu_custom_call.1} parent=1 // pred_region
      %89 = dma.done [#allocation6], 16384
    $region45: #{tpu_custom_call.1} parent=1 // pred_fallthru
      _
    // Predicated region
    $region46: #{tpu_custom_call.1} parent=1 // pred_check
      _
    $region47: #{tpu_custom_call.1} parent=1 // pred_check_branch
      %91 = sbr.rel (0) target = $region49
    $region48: #{tpu_custom_call.1} parent=1 // pred_region
      %92 = dma.done [#allocation6], 4096
    $region49: #{tpu_custom_call.1} parent=1 // pred_fallthru
      _
    // Predicated region
    $region50: #{tpu_custom_call.1} parent=1 // pred_check
      _
    $region51: #{tpu_custom_call.1} parent=1 // pred_check_branch
      %94 = sbr.rel (0) target = $region53
    $region52: #{tpu_custom_call.1} parent=1 // pred_region
      %95 = dma.done [#allocation9], 4096
    $region53: #{tpu_custom_call.1} parent=1 // pred_fallthru
      _
    // Predicated region
    $region54: #{tpu_custom_call.1} parent=1 // pred_check
      _
    $region55: #{tpu_custom_call.1} parent=1 // pred_check_branch
      %97 = sbr.rel (0) target = $region57
    $region56: #{tpu_custom_call.1} parent=1 // pred_region
      %98 = dma.done [#allocation9], 2048
    $region57: #{tpu_custom_call.1} parent=1 // pred_fallthru
      _
    %v100 = vld [vmem:[#allocation2] sm:$0xff]
    %v101 = vld [vmem:[#allocation2 + $0x8] sm:$0xff]
    %v104 = vcombine.high %v100, %v100
    %v106 = vunpack.c.l.s4 1983009808
    %v107 = vunpack.c.0.s8 %v106
    %v108 = vlaneseq
    %v109 = vshrl.u32 %v108, 7
    %v110 = vsub.s32 %v107, %v109
    %v111 = vrot.slane %v100, %v110
    %v113 = vunpack.c.l.s4 1983009808
    %v114 = vunpack.c.0.s8 %v113
    %v115 = vlaneseq
    %v116 = vshrl.u32 %v115, 7
    %v117 = vsub.s32 %v114, %v116
    %v118 = vrot.slane %v104, %v117
    %v119 = vcombine.high %v111, %v111
    %v120 = vcombine.high %v118, %v118
    %v121 = vcombine.high %v101, %v101
    %v123 = vunpack.c.l.s4 1983009808
    %v124 = vunpack.c.0.s8 %v123
    %v125 = vlaneseq
    %v126 = vshrl.u32 %v125, 7
    %v127 = vsub.s32 %v124, %v126
    %v128 = vrot.slane %v101, %v127
    %v130 = vunpack.c.l.s4 1983009808
    %v131 = vunpack.c.0.s8 %v130
    %v132 = vlaneseq
    %v133 = vshrl.u32 %v132, 7
    %v134 = vsub.s32 %v131, %v133
    %v135 = vrot.slane %v121, %v134
    %v136 = vcombine.high %v128, %v128
    %v137 = vcombine.high %v135, %v135
    %v146 = vpack.c.bf16 %v111, %v111
    %v147 = vpack.c.bf16 %v119, %v119
    %v148 = vpack.c.bf16 %v118, %v118
    %v149 = vpack.c.bf16 %v120, %v120
    %v150 = vpack.c.bf16 %v128, %v128
    %v151 = vpack.c.bf16 %v136, %v136
    %v152 = vpack.c.bf16 %v135, %v135
    %v153 = vpack.c.bf16 %v137, %v137
    %v154 = vld [vmem:[#allocation5] sm:$0xff]
    %v155 = vld [vmem:[#allocation5 + $0x8] sm:$0xff]
    %v156 = vld [vmem:[#allocation5 + $0x10] sm:$0xff]
    %v157 = vld [vmem:[#allocation5 + $0x18] sm:$0xff]
    %v158 = vld [vmem:[#allocation5 + $0x20] sm:$0xff]
    %v159 = vld [vmem:[#allocation5 + $0x28] sm:$0xff]
    %v160 = vld [vmem:[#allocation5 + $0x30] sm:$0xff]
    %v161 = vld [vmem:[#allocation5 + $0x38] sm:$0xff]
    %v162 = vld [vmem:[#allocation5 + $0x40] sm:$0xff]
    %v163 = vld [vmem:[#allocation5 + $0x48] sm:$0xff]
    %v164 = vld [vmem:[#allocation5 + $0x50] sm:$0xff]
    %v165 = vld [vmem:[#allocation5 + $0x58] sm:$0xff]
    %v166 = vld [vmem:[#allocation5 + $0x60] sm:$0xff]
    %v167 = vld [vmem:[#allocation5 + $0x68] sm:$0xff]
    %v168 = vld [vmem:[#allocation5 + $0x70] sm:$0xff]
    %v169 = vld [vmem:[#allocation5 + $0x78] sm:$0xff]
    %v170 = vld [vmem:[#allocation5 + $0x80] sm:$0xff]
    %v171 = vld [vmem:[#allocation5 + $0x88] sm:$0xff]
    %v172 = vld [vmem:[#allocation5 + $0x90] sm:$0xff]
    %v173 = vld [vmem:[#allocation5 + $0x98] sm:$0xff]
    %v174 = vld [vmem:[#allocation5 + $0xa0] sm:$0xff]
    %v175 = vld [vmem:[#allocation5 + $0xa8] sm:$0xff]
    %v176 = vld [vmem:[#allocation5 + $0xb0] sm:$0xff]
    %v177 = vld [vmem:[#allocation5 + $0xb8] sm:$0xff]
    %v178 = vld [vmem:[#allocation5 + $0xc0] sm:$0xff]
    %v179 = vld [vmem:[#allocation5 + $0xc8] sm:$0xff]
    %v180 = vld [vmem:[#allocation5 + $0xd0] sm:$0xff]
    %v181 = vld [vmem:[#allocation5 + $0xd8] sm:$0xff]
    %v182 = vld [vmem:[#allocation5 + $0xe0] sm:$0xff]
    %v183 = vld [vmem:[#allocation5 + $0xe8] sm:$0xff]
    %v184 = vld [vmem:[#allocation5 + $0xf0] sm:$0xff]
    %v185 = vld [vmem:[#allocation5 + $0xf8] sm:$0xff]
    %v186 = vld [vmem:[#allocation5 + $0x100] sm:$0xff]
    %v187 = vld [vmem:[#allocation5 + $0x108] sm:$0xff]
    %v188 = vld [vmem:[#allocation5 + $0x110] sm:$0xff]
    %v189 = vld [vmem:[#allocation5 + $0x118] sm:$0xff]
    %v190 = vld [vmem:[#allocation5 + $0x120] sm:$0xff]
    %v191 = vld [vmem:[#allocation5 + $0x128] sm:$0xff]
    %v192 = vld [vmem:[#allocation5 + $0x130] sm:$0xff]
    %v193 = vld [vmem:[#allocation5 + $0x138] sm:$0xff]
    %v194 = vld [vmem:[#allocation5 + $0x140] sm:$0xff]
    %v195 = vld [vmem:[#allocation5 + $0x148] sm:$0xff]
    %v196 = vld [vmem:[#allocation5 + $0x150] sm:$0xff]
    %v197 = vld [vmem:[#allocation5 + $0x158] sm:$0xff]
    %v198 = vld [vmem:[#allocation5 + $0x160] sm:$0xff]
    %v199 = vld [vmem:[#allocation5 + $0x168] sm:$0xff]
    %v200 = vld [vmem:[#allocation5 + $0x170] sm:$0xff]
    %v201 = vld [vmem:[#allocation5 + $0x178] sm:$0xff]
    %v202 = vld [vmem:[#allocation5 + $0x180] sm:$0xff]
    %v203 = vld [vmem:[#allocation5 + $0x188] sm:$0xff]
    %v204 = vld [vmem:[#allocation5 + $0x190] sm:$0xff]
    %v205 = vld [vmem:[#allocation5 + $0x198] sm:$0xff]
    %v206 = vld [vmem:[#allocation5 + $0x1a0] sm:$0xff]
    %v207 = vld [vmem:[#allocation5 + $0x1a8] sm:$0xff]
    %v208 = vld [vmem:[#allocation5 + $0x1b0] sm:$0xff]
    %v209 = vld [vmem:[#allocation5 + $0x1b8] sm:$0xff]
    %v210 = vld [vmem:[#allocation5 + $0x1c0] sm:$0xff]
    %v211 = vld [vmem:[#allocation5 + $0x1c8] sm:$0xff]
    %v212 = vld [vmem:[#allocation5 + $0x1d0] sm:$0xff]
    %v213 = vld [vmem:[#allocation5 + $0x1d8] sm:$0xff]
    %v214 = vld [vmem:[#allocation5 + $0x1e0] sm:$0xff]
    %v215 = vld [vmem:[#allocation5 + $0x1e8] sm:$0xff]
    %v216 = vld [vmem:[#allocation5 + $0x1f0] sm:$0xff]
    %v217 = vld [vmem:[#allocation5 + $0x1f8] sm:$0xff]
    %v218 = vld [vmem:[#allocation5 + $0x200] sm:$0xff]
    %v219 = vld [vmem:[#allocation5 + $0x208] sm:$0xff]
    %v220 = vld [vmem:[#allocation5 + $0x210] sm:$0xff]
    %v221 = vld [vmem:[#allocation5 + $0x218] sm:$0xff]
    %v222 = vld [vmem:[#allocation5 + $0x220] sm:$0xff]
    %v223 = vld [vmem:[#allocation5 + $0x228] sm:$0xff]
    %v224 = vld [vmem:[#allocation5 + $0x230] sm:$0xff]
    %v225 = vld [vmem:[#allocation5 + $0x238] sm:$0xff]
    %v226 = vld [vmem:[#allocation5 + $0x240] sm:$0xff]
    %v227 = vld [vmem:[#allocation5 + $0x248] sm:$0xff]
    %v228 = vld [vmem:[#allocation5 + $0x250] sm:$0xff]
    %v229 = vld [vmem:[#allocation5 + $0x258] sm:$0xff]
    %v230 = vld [vmem:[#allocation5 + $0x260] sm:$0xff]
    %v231 = vld [vmem:[#allocation5 + $0x268] sm:$0xff]
    %v232 = vld [vmem:[#allocation5 + $0x270] sm:$0xff]
    %v233 = vld [vmem:[#allocation5 + $0x278] sm:$0xff]
    %v234 = vld [vmem:[#allocation5 + $0x280] sm:$0xff]
    %v235 = vld [vmem:[#allocation5 + $0x288] sm:$0xff]
    %v236 = vld [vmem:[#allocation5 + $0x290] sm:$0xff]
    %v237 = vld [vmem:[#allocation5 + $0x298] sm:$0xff]
    %v238 = vld [vmem:[#allocation5 + $0x2a0] sm:$0xff]
    %v239 = vld [vmem:[#allocation5 + $0x2a8] sm:$0xff]
    %v240 = vld [vmem:[#allocation5 + $0x2b0] sm:$0xff]
    %v241 = vld [vmem:[#allocation5 + $0x2b8] sm:$0xff]
    %v242 = vld [vmem:[#allocation5 + $0x2c0] sm:$0xff]
    %v243 = vld [vmem:[#allocation5 + $0x2c8] sm:$0xff]
    %v244 = vld [vmem:[#allocation5 + $0x2d0] sm:$0xff]
    %v245 = vld [vmem:[#allocation5 + $0x2d8] sm:$0xff]
    %v246 = vld [vmem:[#allocation5 + $0x2e0] sm:$0xff]
    %v247 = vld [vmem:[#allocation5 + $0x2e8] sm:$0xff]
    %v248 = vld [vmem:[#allocation5 + $0x2f0] sm:$0xff]
    %v249 = vld [vmem:[#allocation5 + $0x2f8] sm:$0xff]
    %v250 = vld [vmem:[#allocation5 + $0x300] sm:$0xff]
    %v251 = vld [vmem:[#allocation5 + $0x308] sm:$0xff]
    %v252 = vld [vmem:[#allocation5 + $0x310] sm:$0xff]
    %v253 = vld [vmem:[#allocation5 + $0x318] sm:$0xff]
    %v254 = vld [vmem:[#allocation5 + $0x320] sm:$0xff]
    %v255 = vld [vmem:[#allocation5 + $0x328] sm:$0xff]
    %v256 = vld [vmem:[#allocation5 + $0x330] sm:$0xff]
    %v257 = vld [vmem:[#allocation5 + $0x338] sm:$0xff]
    %v258 = vld [vmem:[#allocation5 + $0x340] sm:$0xff]
    %v259 = vld [vmem:[#allocation5 + $0x348] sm:$0xff]
    %v260 = vld [vmem:[#allocation5 + $0x350] sm:$0xff]
    %v261 = vld [vmem:[#allocation5 + $0x358] sm:$0xff]
    %v262 = vld [vmem:[#allocation5 + $0x360] sm:$0xff]
    %v263 = vld [vmem:[#allocation5 + $0x368] sm:$0xff]
    %v264 = vld [vmem:[#allocation5 + $0x370] sm:$0xff]
    %v265 = vld [vmem:[#allocation5 + $0x378] sm:$0xff]
    %v266 = vld [vmem:[#allocation5 + $0x380] sm:$0xff]
    %v267 = vld [vmem:[#allocation5 + $0x388] sm:$0xff]
    %v268 = vld [vmem:[#allocation5 + $0x390] sm:$0xff]
    %v269 = vld [vmem:[#allocation5 + $0x398] sm:$0xff]
    %v270 = vld [vmem:[#allocation5 + $0x3a0] sm:$0xff]
    %v271 = vld [vmem:[#allocation5 + $0x3a8] sm:$0xff]
    %v272 = vld [vmem:[#allocation5 + $0x3b0] sm:$0xff]
    %v273 = vld [vmem:[#allocation5 + $0x3b8] sm:$0xff]
    %v274 = vld [vmem:[#allocation5 + $0x3c0] sm:$0xff]
    %v275 = vld [vmem:[#allocation5 + $0x3c8] sm:$0xff]
    %v276 = vld [vmem:[#allocation5 + $0x3d0] sm:$0xff]
    %v277 = vld [vmem:[#allocation5 + $0x3d8] sm:$0xff]
    %v278 = vld [vmem:[#allocation5 + $0x3e0] sm:$0xff]
    %v279 = vld [vmem:[#allocation5 + $0x3e8] sm:$0xff]
    %v280 = vld [vmem:[#allocation5 + $0x3f0] sm:$0xff]
    %v281 = vld [vmem:[#allocation5 + $0x3f8] sm:$0xff]
    %v282 = vld [vmem:[%s2] sm:$0x3]
    %v284 = vlaneseq
    %v285 = vshrl.u32 %v284, 7
    %v286 = vsub.s32 0, %v285
    %v287 = vrot.slane %v282, %v286
    %v288 = vlaneseq
    %v289 = vshrl.u32 %v288, 7
    %v290 = vsub.s32 1, %v289
    %v291 = vrot.slane %v282, %v290
    %v422 = vunpack.c.l.b16 %v154
    %v423 = vunpack.c.h.b16 %v154
    %v424 = vunpack.c.l.b16 %v155
    %v425 = vunpack.c.h.b16 %v155
    %v426 = vunpack.c.l.b16 %v156
    %v427 = vunpack.c.h.b16 %v156
    %v428 = vunpack.c.l.b16 %v157
    %v429 = vunpack.c.h.b16 %v157
    %v430 = vunpack.c.l.b16 %v158
    %v431 = vunpack.c.h.b16 %v158
    %v432 = vunpack.c.l.b16 %v159
    %v433 = vunpack.c.h.b16 %v159
    %v434 = vunpack.c.l.b16 %v160
    %v435 = vunpack.c.h.b16 %v160
    %v436 = vunpack.c.l.b16 %v161
    %v437 = vunpack.c.h.b16 %v161
    %v438 = vunpack.c.l.b16 %v162
    %v439 = vunpack.c.h.b16 %v162
    %v440 = vunpack.c.l.b16 %v163
    %v441 = vunpack.c.h.b16 %v163
    %v442 = vunpack.c.l.b16 %v164
    %v443 = vunpack.c.h.b16 %v164
    %v444 = vunpack.c.l.b16 %v165
    %v445 = vunpack.c.h.b16 %v165
    %v446 = vunpack.c.l.b16 %v166
    %v447 = vunpack.c.h.b16 %v166
    %v448 = vunpack.c.l.b16 %v167
    %v449 = vunpack.c.h.b16 %v167
    %v450 = vunpack.c.l.b16 %v168
    %v451 = vunpack.c.h.b16 %v168
    %v452 = vunpack.c.l.b16 %v169
    %v453 = vunpack.c.h.b16 %v169
    %v454 = vunpack.c.l.b16 %v170
    %v455 = vunpack.c.h.b16 %v170
    %v456 = vunpack.c.l.b16 %v171
    %v457 = vunpack.c.h.b16 %v171
    %v458 = vunpack.c.l.b16 %v172
    %v459 = vunpack.c.h.b16 %v172
    %v460 = vunpack.c.l.b16 %v173
    %v461 = vunpack.c.h.b16 %v173
    %v462 = vunpack.c.l.b16 %v174
    %v463 = vunpack.c.h.b16 %v174
    %v464 = vunpack.c.l.b16 %v175
    %v465 = vunpack.c.h.b16 %v175
    %v466 = vunpack.c.l.b16 %v176
    %v467 = vunpack.c.h.b16 %v176
    %v468 = vunpack.c.l.b16 %v177
    %v469 = vunpack.c.h.b16 %v177
    %v470 = vunpack.c.l.b16 %v178
    %v471 = vunpack.c.h.b16 %v178
    %v472 = vunpack.c.l.b16 %v179
    %v473 = vunpack.c.h.b16 %v179
    %v474 = vunpack.c.l.b16 %v180
    %v475 = vunpack.c.h.b16 %v180
    %v476 = vunpack.c.l.b16 %v181
    %v477 = vunpack.c.h.b16 %v181
    %v478 = vunpack.c.l.b16 %v182
    %v479 = vunpack.c.h.b16 %v182
    %v480 = vunpack.c.l.b16 %v183
    %v481 = vunpack.c.h.b16 %v183
    %v482 = vunpack.c.l.b16 %v184
    %v483 = vunpack.c.h.b16 %v184
    %v484 = vunpack.c.l.b16 %v185
    %v485 = vunpack.c.h.b16 %v185
    %v486 = vunpack.c.l.b16 %v186
    %v487 = vunpack.c.h.b16 %v186
    %v488 = vunpack.c.l.b16 %v187
    %v489 = vunpack.c.h.b16 %v187
    %v490 = vunpack.c.l.b16 %v188
    %v491 = vunpack.c.h.b16 %v188
    %v492 = vunpack.c.l.b16 %v189
    %v493 = vunpack.c.h.b16 %v189
    %v494 = vunpack.c.l.b16 %v190
    %v495 = vunpack.c.h.b16 %v190
    %v496 = vunpack.c.l.b16 %v191
    %v497 = vunpack.c.h.b16 %v191
    %v498 = vunpack.c.l.b16 %v192
    %v499 = vunpack.c.h.b16 %v192
    %v500 = vunpack.c.l.b16 %v193
    %v501 = vunpack.c.h.b16 %v193
    %v502 = vunpack.c.l.b16 %v194
    %v503 = vunpack.c.h.b16 %v194
    %v504 = vunpack.c.l.b16 %v195
    %v505 = vunpack.c.h.b16 %v195
    %v506 = vunpack.c.l.b16 %v196
    %v507 = vunpack.c.h.b16 %v196
    %v508 = vunpack.c.l.b16 %v197
    %v509 = vunpack.c.h.b16 %v197
    %v510 = vunpack.c.l.b16 %v198
    %v511 = vunpack.c.h.b16 %v198
    %v512 = vunpack.c.l.b16 %v199
    %v513 = vunpack.c.h.b16 %v199
    %v514 = vunpack.c.l.b16 %v200
    %v515 = vunpack.c.h.b16 %v200
    %v516 = vunpack.c.l.b16 %v201
    %v517 = vunpack.c.h.b16 %v201
    %v518 = vunpack.c.l.b16 %v202
    %v519 = vunpack.c.h.b16 %v202
    %v520 = vunpack.c.l.b16 %v203
    %v521 = vunpack.c.h.b16 %v203
    %v522 = vunpack.c.l.b16 %v204
    %v523 = vunpack.c.h.b16 %v204
    %v524 = vunpack.c.l.b16 %v205
    %v525 = vunpack.c.h.b16 %v205
    %v526 = vunpack.c.l.b16 %v206
    %v527 = vunpack.c.h.b16 %v206
    %v528 = vunpack.c.l.b16 %v207
    %v529 = vunpack.c.h.b16 %v207
    %v530 = vunpack.c.l.b16 %v208
    %v531 = vunpack.c.h.b16 %v208
    %v532 = vunpack.c.l.b16 %v209
    %v533 = vunpack.c.h.b16 %v209
    %v534 = vunpack.c.l.b16 %v210
    %v535 = vunpack.c.h.b16 %v210
    %v536 = vunpack.c.l.b16 %v211
    %v537 = vunpack.c.h.b16 %v211
    %v538 = vunpack.c.l.b16 %v212
    %v539 = vunpack.c.h.b16 %v212
    %v540 = vunpack.c.l.b16 %v213
    %v541 = vunpack.c.h.b16 %v213
    %v542 = vunpack.c.l.b16 %v214
    %v543 = vunpack.c.h.b16 %v214
    %v544 = vunpack.c.l.b16 %v215
    %v545 = vunpack.c.h.b16 %v215
    %v546 = vunpack.c.l.b16 %v216
    %v547 = vunpack.c.h.b16 %v216
    %v548 = vunpack.c.l.b16 %v217
    %v549 = vunpack.c.h.b16 %v217
    %v550 = vunpack.c.l.b16 %v218
    %v551 = vunpack.c.h.b16 %v218
    %v552 = vunpack.c.l.b16 %v219
    %v553 = vunpack.c.h.b16 %v219
    %v554 = vunpack.c.l.b16 %v220
    %v555 = vunpack.c.h.b16 %v220
    %v556 = vunpack.c.l.b16 %v221
    %v557 = vunpack.c.h.b16 %v221
    %v558 = vunpack.c.l.b16 %v222
    %v559 = vunpack.c.h.b16 %v222
    %v560 = vunpack.c.l.b16 %v223
    %v561 = vunpack.c.h.b16 %v223
    %v562 = vunpack.c.l.b16 %v224
    %v563 = vunpack.c.h.b16 %v224
    %v564 = vunpack.c.l.b16 %v225
    %v565 = vunpack.c.h.b16 %v225
    %v566 = vunpack.c.l.b16 %v226
    %v567 = vunpack.c.h.b16 %v226
    %v568 = vunpack.c.l.b16 %v227
    %v569 = vunpack.c.h.b16 %v227
    %v570 = vunpack.c.l.b16 %v228
    %v571 = vunpack.c.h.b16 %v228
    %v572 = vunpack.c.l.b16 %v229
    %v573 = vunpack.c.h.b16 %v229
    %v574 = vunpack.c.l.b16 %v230
    %v575 = vunpack.c.h.b16 %v230
    %v576 = vunpack.c.l.b16 %v231
    %v577 = vunpack.c.h.b16 %v231
    %v578 = vunpack.c.l.b16 %v232
    %v579 = vunpack.c.h.b16 %v232
    %v580 = vunpack.c.l.b16 %v233
    %v581 = vunpack.c.h.b16 %v233
    %v582 = vunpack.c.l.b16 %v234
    %v583 = vunpack.c.h.b16 %v234
    %v584 = vunpack.c.l.b16 %v235
    %v585 = vunpack.c.h.b16 %v235
    %v586 = vunpack.c.l.b16 %v236
    %v587 = vunpack.c.h.b16 %v236
    %v588 = vunpack.c.l.b16 %v237
    %v589 = vunpack.c.h.b16 %v237
    %v590 = vunpack.c.l.b16 %v238
    %v591 = vunpack.c.h.b16 %v238
    %v592 = vunpack.c.l.b16 %v239
    %v593 = vunpack.c.h.b16 %v239
    %v594 = vunpack.c.l.b16 %v240
    %v595 = vunpack.c.h.b16 %v240
    %v596 = vunpack.c.l.b16 %v241
    %v597 = vunpack.c.h.b16 %v241
    %v598 = vunpack.c.l.b16 %v242
    %v599 = vunpack.c.h.b16 %v242
    %v600 = vunpack.c.l.b16 %v243
    %v601 = vunpack.c.h.b16 %v243
    %v602 = vunpack.c.l.b16 %v244
    %v603 = vunpack.c.h.b16 %v244
    %v604 = vunpack.c.l.b16 %v245
    %v605 = vunpack.c.h.b16 %v245
    %v606 = vunpack.c.l.b16 %v246
    %v607 = vunpack.c.h.b16 %v246
    %v608 = vunpack.c.l.b16 %v247
    %v609 = vunpack.c.h.b16 %v247
    %v610 = vunpack.c.l.b16 %v248
    %v611 = vunpack.c.h.b16 %v248
    %v612 = vunpack.c.l.b16 %v249
    %v613 = vunpack.c.h.b16 %v249
    %v614 = vunpack.c.l.b16 %v250
    %v615 = vunpack.c.h.b16 %v250
    %v616 = vunpack.c.l.b16 %v251
    %v617 = vunpack.c.h.b16 %v251
    %v618 = vunpack.c.l.b16 %v252
    %v619 = vunpack.c.h.b16 %v252
    %v620 = vunpack.c.l.b16 %v253
    %v621 = vunpack.c.h.b16 %v253
    %v622 = vunpack.c.l.b16 %v254
    %v623 = vunpack.c.h.b16 %v254
    %v624 = vunpack.c.l.b16 %v255
    %v625 = vunpack.c.h.b16 %v255
    %v626 = vunpack.c.l.b16 %v256
    %v627 = vunpack.c.h.b16 %v256
    %v628 = vunpack.c.l.b16 %v257
    %v629 = vunpack.c.h.b16 %v257
    %v630 = vunpack.c.l.b16 %v258
    %v631 = vunpack.c.h.b16 %v258
    %v632 = vunpack.c.l.b16 %v259
    %v633 = vunpack.c.h.b16 %v259
    %v634 = vunpack.c.l.b16 %v260
    %v635 = vunpack.c.h.b16 %v260
    %v636 = vunpack.c.l.b16 %v261
    %v637 = vunpack.c.h.b16 %v261
    %v638 = vunpack.c.l.b16 %v262
    %v639 = vunpack.c.h.b16 %v262
    %v640 = vunpack.c.l.b16 %v263
    %v641 = vunpack.c.h.b16 %v263
    %v642 = vunpack.c.l.b16 %v264
    %v643 = vunpack.c.h.b16 %v264
    %v644 = vunpack.c.l.b16 %v265
    %v645 = vunpack.c.h.b16 %v265
    %v646 = vunpack.c.l.b16 %v266
    %v647 = vunpack.c.h.b16 %v266
    %v648 = vunpack.c.l.b16 %v267
    %v649 = vunpack.c.h.b16 %v267
    %v650 = vunpack.c.l.b16 %v268
    %v651 = vunpack.c.h.b16 %v268
    %v652 = vunpack.c.l.b16 %v269
    %v653 = vunpack.c.h.b16 %v269
    %v654 = vunpack.c.l.b16 %v270
    %v655 = vunpack.c.h.b16 %v270
    %v656 = vunpack.c.l.b16 %v271
    %v657 = vunpack.c.h.b16 %v271
    %v658 = vunpack.c.l.b16 %v272
    %v659 = vunpack.c.h.b16 %v272
    %v660 = vunpack.c.l.b16 %v273
    %v661 = vunpack.c.h.b16 %v273
    %v662 = vunpack.c.l.b16 %v274
    %v663 = vunpack.c.h.b16 %v274
    %v664 = vunpack.c.l.b16 %v275
    %v665 = vunpack.c.h.b16 %v275
    %v666 = vunpack.c.l.b16 %v276
    %v667 = vunpack.c.h.b16 %v276
    %v668 = vunpack.c.l.b16 %v277
    %v669 = vunpack.c.h.b16 %v277
    %v670 = vunpack.c.l.b16 %v278
    %v671 = vunpack.c.h.b16 %v278
    %v672 = vunpack.c.l.b16 %v279
    %v673 = vunpack.c.h.b16 %v279
    %v674 = vunpack.c.l.b16 %v280
    %v675 = vunpack.c.h.b16 %v280
    %v676 = vunpack.c.l.b16 %v281
    %v677 = vunpack.c.h.b16 %v281
    %v678 = vpack.c.b16 %v424, %v422
    %v679 = vpack.c.b16 %v425, %v423
    %v680 = vpack.c.b16 %v428, %v426
    %v681 = vpack.c.b16 %v429, %v427
    %v682 = vpack.c.b16 %v432, %v430
    %v683 = vpack.c.b16 %v433, %v431
    %v684 = vpack.c.b16 %v436, %v434
    %v685 = vpack.c.b16 %v437, %v435
    %v686 = vpack.c.b16 %v440, %v438
    %v687 = vpack.c.b16 %v441, %v439
    %v688 = vpack.c.b16 %v444, %v442
    %v689 = vpack.c.b16 %v445, %v443
    %v690 = vpack.c.b16 %v448, %v446
    %v691 = vpack.c.b16 %v449, %v447
    %v692 = vpack.c.b16 %v452, %v450
    %v693 = vpack.c.b16 %v453, %v451
    %v694 = vpack.c.b16 %v456, %v454
    %v695 = vpack.c.b16 %v457, %v455
    %v696 = vpack.c.b16 %v460, %v458
    %v697 = vpack.c.b16 %v461, %v459
    %v698 = vpack.c.b16 %v464, %v462
    %v699 = vpack.c.b16 %v465, %v463
    %v700 = vpack.c.b16 %v468, %v466
    %v701 = vpack.c.b16 %v469, %v467
    %v702 = vpack.c.b16 %v472, %v470
    %v703 = vpack.c.b16 %v473, %v471
    %v704 = vpack.c.b16 %v476, %v474
    %v705 = vpack.c.b16 %v477, %v475
    %v706 = vpack.c.b16 %v480, %v478
    %v707 = vpack.c.b16 %v481, %v479
    %v708 = vpack.c.b16 %v484, %v482
    %v709 = vpack.c.b16 %v485, %v483
    %v710 = vpack.c.b16 %v488, %v486
    %v711 = vpack.c.b16 %v489, %v487
    %v712 = vpack.c.b16 %v492, %v490
    %v713 = vpack.c.b16 %v493, %v491
    %v714 = vpack.c.b16 %v496, %v494
    %v715 = vpack.c.b16 %v497, %v495
    %v716 = vpack.c.b16 %v500, %v498
    %v717 = vpack.c.b16 %v501, %v499
    %v718 = vpack.c.b16 %v504, %v502
    %v719 = vpack.c.b16 %v505, %v503
    %v720 = vpack.c.b16 %v508, %v506
    %v721 = vpack.c.b16 %v509, %v507
    %v722 = vpack.c.b16 %v512, %v510
    %v723 = vpack.c.b16 %v513, %v511
    %v724 = vpack.c.b16 %v516, %v514
    %v725 = vpack.c.b16 %v517, %v515
    %v726 = vpack.c.b16 %v520, %v518
    %v727 = vpack.c.b16 %v521, %v519
    %v728 = vpack.c.b16 %v524, %v522
    %v729 = vpack.c.b16 %v525, %v523
    %v730 = vpack.c.b16 %v528, %v526
    %v731 = vpack.c.b16 %v529, %v527
    %v732 = vpack.c.b16 %v532, %v530
    %v733 = vpack.c.b16 %v533, %v531
    %v734 = vpack.c.b16 %v536, %v534
    %v735 = vpack.c.b16 %v537, %v535
    %v736 = vpack.c.b16 %v540, %v538
    %v737 = vpack.c.b16 %v541, %v539
    %v738 = vpack.c.b16 %v544, %v542
    %v739 = vpack.c.b16 %v545, %v543
    %v740 = vpack.c.b16 %v548, %v546
    %v741 = vpack.c.b16 %v549, %v547
    %v742 = vpack.c.b16 %v552, %v550
    %v743 = vpack.c.b16 %v553, %v551
    %v744 = vpack.c.b16 %v556, %v554
    %v745 = vpack.c.b16 %v557, %v555
    %v746 = vpack.c.b16 %v560, %v558
    %v747 = vpack.c.b16 %v561, %v559
    %v748 = vpack.c.b16 %v564, %v562
    %v749 = vpack.c.b16 %v565, %v563
    %v750 = vpack.c.b16 %v568, %v566
    %v751 = vpack.c.b16 %v569, %v567
    %v752 = vpack.c.b16 %v572, %v570
    %v753 = vpack.c.b16 %v573, %v571
    %v754 = vpack.c.b16 %v576, %v574
    %v755 = vpack.c.b16 %v577, %v575
    %v756 = vpack.c.b16 %v580, %v578
    %v757 = vpack.c.b16 %v581, %v579
    %v758 = vpack.c.b16 %v584, %v582
    %v759 = vpack.c.b16 %v585, %v583
    %v760 = vpack.c.b16 %v588, %v586
    %v761 = vpack.c.b16 %v589, %v587
    %v762 = vpack.c.b16 %v592, %v590
    %v763 = vpack.c.b16 %v593, %v591
    %v764 = vpack.c.b16 %v596, %v594
    %v765 = vpack.c.b16 %v597, %v595
    %v766 = vpack.c.b16 %v600, %v598
    %v767 = vpack.c.b16 %v601, %v599
    %v768 = vpack.c.b16 %v604, %v602
    %v769 = vpack.c.b16 %v605, %v603
    %v770 = vpack.c.b16 %v608, %v606
    %v771 = vpack.c.b16 %v609, %v607
    %v772 = vpack.c.b16 %v612, %v610
    %v773 = vpack.c.b16 %v613, %v611
    %v774 = vpack.c.b16 %v616, %v614
    %v775 = vpack.c.b16 %v617, %v615
    %v776 = vpack.c.b16 %v620, %v618
    %v777 = vpack.c.b16 %v621, %v619
    %v778 = vpack.c.b16 %v624, %v622
    %v779 = vpack.c.b16 %v625, %v623
    %v780 = vpack.c.b16 %v628, %v626
    %v781 = vpack.c.b16 %v629, %v627
    %v782 = vpack.c.b16 %v632, %v630
    %v783 = vpack.c.b16 %v633, %v631
    %v784 = vpack.c.b16 %v636, %v634
    %v785 = vpack.c.b16 %v637, %v635
    %v786 = vpack.c.b16 %v640, %v638
    %v787 = vpack.c.b16 %v641, %v639
    %v788 = vpack.c.b16 %v644, %v642
    %v789 = vpack.c.b16 %v645, %v643
    %v790 = vpack.c.b16 %v648, %v646
    %v791 = vpack.c.b16 %v649, %v647
    %v792 = vpack.c.b16 %v652, %v650
    %v793 = vpack.c.b16 %v653, %v651
    %v794 = vpack.c.b16 %v656, %v654
    %v795 = vpack.c.b16 %v657, %v655
    %v796 = vpack.c.b16 %v660, %v658
    %v797 = vpack.c.b16 %v661, %v659
    %v798 = vpack.c.b16 %v664, %v662
    %v799 = vpack.c.b16 %v665, %v663
    %v800 = vpack.c.b16 %v668, %v666
    %v801 = vpack.c.b16 %v669, %v667
    %v802 = vpack.c.b16 %v672, %v670
    %v803 = vpack.c.b16 %v673, %v671
    %v804 = vpack.c.b16 %v676, %v674
    %v805 = vpack.c.b16 %v677, %v675
    %934 = vmatprep.subr.bf16.mxu0 %v693
    %935 = vmatpush1.bf16.msra.mxu0 %v692
    %936 = vmatprep.subr.bf16.mxu0 %v691
    %937 = vmatpush1.bf16.msra.mxu0 %v690
    %938 = vmatprep.subr.bf16.mxu0 %v689
    %939 = vmatpush1.bf16.msra.mxu0 %v688
    %940 = vmatprep.subr.bf16.mxu0 %v687
    %941 = vmatpush1.bf16.msra.mxu0 %v686
    %942 = vmatprep.subr.bf16.mxu0 %v685
    %943 = vmatpush1.bf16.msra.mxu0 %v684
    %944 = vmatprep.subr.bf16.mxu0 %v683
    %945 = vmatpush1.bf16.msra.mxu0 %v682
    %946 = vmatprep.subr.bf16.mxu0 %v681
    %947 = vmatpush1.bf16.msra.mxu0 %v680
    %948 = vmatprep.subr.bf16.mxu0 %v679
    %949 = vmatpush1.bf16.msra.mxu0 %v678
    %950 = vmatprep.subr.bf16.mxu0 %v709
    %951 = vmatpush2.bf16.msra.mxu0 %v708
    %952 = vmatprep.subr.bf16.mxu0 %v707
    %953 = vmatpush2.bf16.msra.mxu0 %v706
    %954 = vmatprep.subr.bf16.mxu0 %v705
    %955 = vmatpush2.bf16.msra.mxu0 %v704
    %956 = vmatprep.subr.bf16.mxu0 %v703
    %957 = vmatpush2.bf16.msra.mxu0 %v702
    %958 = vmatprep.subr.bf16.mxu0 %v701
    %959 = vmatpush2.bf16.msra.mxu0 %v700
    %960 = vmatprep.subr.bf16.mxu0 %v699
    %961 = vmatpush2.bf16.msra.mxu0 %v698
    %962 = vmatprep.subr.bf16.mxu0 %v697
    %963 = vmatpush2.bf16.msra.mxu0 %v696
    %964 = vmatprep.subr.bf16.mxu0 %v695
    %965 = vmatpush2.bf16.msra.mxu0 %v694
    %966 = vmatprep.mubr.bf16.mxu0 %v147
    %967 = vmatmul.mubr.bf16.gmra.mxu0 %v146
    %v968 = vpop.f32.mrf.mxu0
    %v969 = vadd.f32 %v287, %v968
    %v970 = vpop.f32.mrf.mxu0
    %v971 = vadd.f32 %v291, %v970
    %v972 = vpop.f32.mrf.mxu0
    %v973 = vpop.f32.mrf.mxu0
    %974 = vdwg.mxu0
    %975 = vmatprep.subr.bf16.mxu0 %v725
    %976 = vmatpush1.bf16.msra.mxu0 %v724
    %977 = vmatprep.subr.bf16.mxu0 %v723
    %978 = vmatpush1.bf16.msra.mxu0 %v722
    %979 = vmatprep.subr.bf16.mxu0 %v721
    %980 = vmatpush1.bf16.msra.mxu0 %v720
    %981 = vmatprep.subr.bf16.mxu0 %v719
    %982 = vmatpush1.bf16.msra.mxu0 %v718
    %983 = vmatprep.subr.bf16.mxu0 %v717
    %984 = vmatpush1.bf16.msra.mxu0 %v716
    %985 = vmatprep.subr.bf16.mxu0 %v715
    %986 = vmatpush1.bf16.msra.mxu0 %v714
    %987 = vmatprep.subr.bf16.mxu0 %v713
    %988 = vmatpush1.bf16.msra.mxu0 %v712
    %989 = vmatprep.subr.bf16.mxu0 %v711
    %990 = vmatpush1.bf16.msra.mxu0 %v710
    %991 = vmatprep.subr.bf16.mxu0 %v741
    %992 = vmatpush2.bf16.msra.mxu0 %v740
    %993 = vmatprep.subr.bf16.mxu0 %v739
    %994 = vmatpush2.bf16.msra.mxu0 %v738
    %995 = vmatprep.subr.bf16.mxu0 %v737
    %996 = vmatpush2.bf16.msra.mxu0 %v736
    %997 = vmatprep.subr.bf16.mxu0 %v735
    %998 = vmatpush2.bf16.msra.mxu0 %v734
    %999 = vmatprep.subr.bf16.mxu0 %v733
    %1000 = vmatpush2.bf16.msra.mxu0 %v732
    %1001 = vmatprep.subr.bf16.mxu0 %v731
    %1002 = vmatpush2.bf16.msra.mxu0 %v730
    %1003 = vmatprep.subr.bf16.mxu0 %v729
    %1004 = vmatpush2.bf16.msra.mxu0 %v728
    %1005 = vmatprep.subr.bf16.mxu0 %v727
    %1006 = vmatpush2.bf16.msra.mxu0 %v726
    %1007 = vmatprep.mubr.bf16.mxu0 %v149
    %1008 = vmatmul.mubr.bf16.gmra.mxu0 %v148
    %v1009 = vpop.f32.mrf.mxu0
    %v1010 = vadd.f32 %v969, %v1009
    %v1011 = vpop.f32.mrf.mxu0
    %v1012 = vadd.f32 %v971, %v1011
    %v1013 = vpop.f32.mrf.mxu0
    %v1014 = vpop.f32.mrf.mxu0
    %1015 = vdwg.mxu0
    %1016 = vmatprep.subr.bf16.mxu0 %v757
    %1017 = vmatpush1.bf16.msra.mxu0 %v756
    %1018 = vmatprep.subr.bf16.mxu0 %v755
    %1019 = vmatpush1.bf16.msra.mxu0 %v754
    %1020 = vmatprep.subr.bf16.mxu0 %v753
    %1021 = vmatpush1.bf16.msra.mxu0 %v752
    %1022 = vmatprep.subr.bf16.mxu0 %v751
    %1023 = vmatpush1.bf16.msra.mxu0 %v750
    %1024 = vmatprep.subr.bf16.mxu0 %v749
    %1025 = vmatpush1.bf16.msra.mxu0 %v748
    %1026 = vmatprep.subr.bf16.mxu0 %v747
    %1027 = vmatpush1.bf16.msra.mxu0 %v746
    %1028 = vmatprep.subr.bf16.mxu0 %v745
    %1029 = vmatpush1.bf16.msra.mxu0 %v744
    %1030 = vmatprep.subr.bf16.mxu0 %v743
    %1031 = vmatpush1.bf16.msra.mxu0 %v742
    %1032 = vmatprep.subr.bf16.mxu0 %v773
    %1033 = vmatpush2.bf16.msra.mxu0 %v772
    %1034 = vmatprep.subr.bf16.mxu0 %v771
    %1035 = vmatpush2.bf16.msra.mxu0 %v770
    %1036 = vmatprep.subr.bf16.mxu0 %v769
    %1037 = vmatpush2.bf16.msra.mxu0 %v768
    %1038 = vmatprep.subr.bf16.mxu0 %v767
    %1039 = vmatpush2.bf16.msra.mxu0 %v766
    %1040 = vmatprep.subr.bf16.mxu0 %v765
    %1041 = vmatpush2.bf16.msra.mxu0 %v764
    %1042 = vmatprep.subr.bf16.mxu0 %v763
    %1043 = vmatpush2.bf16.msra.mxu0 %v762
    %1044 = vmatprep.subr.bf16.mxu0 %v761
    %1045 = vmatpush2.bf16.msra.mxu0 %v760
    %1046 = vmatprep.subr.bf16.mxu0 %v759
    %1047 = vmatpush2.bf16.msra.mxu0 %v758
    %1048 = vmatprep.mubr.bf16.mxu0 %v151
    %1049 = vmatmul.mubr.bf16.gmra.mxu0 %v150
    %v1050 = vpop.f32.mrf.mxu0
    %v1051 = vadd.f32 %v1010, %v1050
    %v1052 = vpop.f32.mrf.mxu0
    %v1053 = vadd.f32 %v1012, %v1052
    %v1054 = vpop.f32.mrf.mxu0
    %v1055 = vpop.f32.mrf.mxu0
    %1056 = vdwg.mxu0
    %1057 = vmatprep.subr.bf16.mxu0 %v789
    %1058 = vmatpush1.bf16.msra.mxu0 %v788
    %1059 = vmatprep.subr.bf16.mxu0 %v787
    %1060 = vmatpush1.bf16.msra.mxu0 %v786
    %1061 = vmatprep.subr.bf16.mxu0 %v785
    %1062 = vmatpush1.bf16.msra.mxu0 %v784
    %1063 = vmatprep.subr.bf16.mxu0 %v783
    %1064 = vmatpush1.bf16.msra.mxu0 %v782
    %1065 = vmatprep.subr.bf16.mxu0 %v781
    %1066 = vmatpush1.bf16.msra.mxu0 %v780
    %1067 = vmatprep.subr.bf16.mxu0 %v779
    %1068 = vmatpush1.bf16.msra.mxu0 %v778
    %1069 = vmatprep.subr.bf16.mxu0 %v777
    %1070 = vmatpush1.bf16.msra.mxu0 %v776
    %1071 = vmatprep.subr.bf16.mxu0 %v775
    %1072 = vmatpush1.bf16.msra.mxu0 %v774
    %1073 = vmatprep.subr.bf16.mxu0 %v805
    %1074 = vmatpush2.bf16.msra.mxu0 %v804
    %1075 = vmatprep.subr.bf16.mxu0 %v803
    %1076 = vmatpush2.bf16.msra.mxu0 %v802
    %1077 = vmatprep.subr.bf16.mxu0 %v801
    %1078 = vmatpush2.bf16.msra.mxu0 %v800
    %1079 = vmatprep.subr.bf16.mxu0 %v799
    %1080 = vmatpush2.bf16.msra.mxu0 %v798
    %1081 = vmatprep.subr.bf16.mxu0 %v797
    %1082 = vmatpush2.bf16.msra.mxu0 %v796
    %1083 = vmatprep.subr.bf16.mxu0 %v795
    %1084 = vmatpush2.bf16.msra.mxu0 %v794
    %1085 = vmatprep.subr.bf16.mxu0 %v793
    %1086 = vmatpush2.bf16.msra.mxu0 %v792
    %1087 = vmatprep.subr.bf16.mxu0 %v791
    %1088 = vmatpush2.bf16.msra.mxu0 %v790
    %1089 = vmatprep.mubr.bf16.mxu0 %v153
    %1090 = vmatmul.mubr.bf16.gmra.mxu0 %v152
    %v1091 = vpop.f32.mrf.mxu0
    %v1092 = vadd.f32 %v1051, %v1091
    %v1093 = vpop.f32.mrf.mxu0
    %v1094 = vadd.f32 %v1053, %v1093
    %v1095 = vpop.f32.mrf.mxu0
    %v1096 = vpop.f32.mrf.mxu0
    %1097 = vdwg.mxu0
    %v1098 = vpack.c.bf16 %v1092, %v1092
    %v1099 = vpack.c.bf16 %v1094, %v1094
    %v1100 = vmax.bf16 %v1098, 0
    %v1101 = vmax.bf16 %v1099, 0
    %v1102 = vld [vmem:[#allocation7] sm:$0xff]
    %v1103 = vld [vmem:[#allocation7 + $0x8] sm:$0xff]
    %v1104 = vld [vmem:[#allocation7 + $0x10] sm:$0xff]
    %v1105 = vld [vmem:[#allocation7 + $0x18] sm:$0xff]
    %v1106 = vld [vmem:[#allocation7 + $0x20] sm:$0xff]
    %v1107 = vld [vmem:[#allocation7 + $0x28] sm:$0xff]
    %v1108 = vld [vmem:[#allocation7 + $0x30] sm:$0xff]
    %v1109 = vld [vmem:[#allocation7 + $0x38] sm:$0xff]
    %v1110 = vld [vmem:[#allocation7 + $0x40] sm:$0xff]
    %v1111 = vld [vmem:[#allocation7 + $0x48] sm:$0xff]
    %v1112 = vld [vmem:[#allocation7 + $0x50] sm:$0xff]
    %v1113 = vld [vmem:[#allocation7 + $0x58] sm:$0xff]
    %v1114 = vld [vmem:[#allocation7 + $0x60] sm:$0xff]
    %v1115 = vld [vmem:[#allocation7 + $0x68] sm:$0xff]
    %v1116 = vld [vmem:[#allocation7 + $0x70] sm:$0xff]
    %v1117 = vld [vmem:[#allocation7 + $0x78] sm:$0xff]
    %v1118 = vld [vmem:[#allocation7 + $0x80] sm:$0xff]
    %v1119 = vld [vmem:[#allocation7 + $0x88] sm:$0xff]
    %v1120 = vld [vmem:[#allocation7 + $0x90] sm:$0xff]
    %v1121 = vld [vmem:[#allocation7 + $0x98] sm:$0xff]
    %v1122 = vld [vmem:[#allocation7 + $0xa0] sm:$0xff]
    %v1123 = vld [vmem:[#allocation7 + $0xa8] sm:$0xff]
    %v1124 = vld [vmem:[#allocation7 + $0xb0] sm:$0xff]
    %v1125 = vld [vmem:[#allocation7 + $0xb8] sm:$0xff]
    %v1126 = vld [vmem:[#allocation7 + $0xc0] sm:$0xff]
    %v1127 = vld [vmem:[#allocation7 + $0xc8] sm:$0xff]
    %v1128 = vld [vmem:[#allocation7 + $0xd0] sm:$0xff]
    %v1129 = vld [vmem:[#allocation7 + $0xd8] sm:$0xff]
    %v1130 = vld [vmem:[#allocation7 + $0xe0] sm:$0xff]
    %v1131 = vld [vmem:[#allocation7 + $0xe8] sm:$0xff]
    %v1132 = vld [vmem:[#allocation7 + $0xf0] sm:$0xff]
    %v1133 = vld [vmem:[#allocation7 + $0xf8] sm:$0xff]
    %v1134 = vld [vmem:[%s4] sm:$0x3]
    %v1136 = vlaneseq
    %v1137 = vshrl.u32 %v1136, 7
    %v1138 = vsub.s32 0, %v1137
    %v1139 = vrot.slane %v1134, %v1138
    %v1140 = vlaneseq
    %v1141 = vshrl.u32 %v1140, 7
    %v1142 = vsub.s32 1, %v1141
    %v1143 = vrot.slane %v1134, %v1142
    %v1178 = vunpack.c.l.b16 %v1102
    %v1179 = vunpack.c.h.b16 %v1102
    %v1180 = vunpack.c.l.b16 %v1103
    %v1181 = vunpack.c.h.b16 %v1103
    %v1182 = vunpack.c.l.b16 %v1104
    %v1183 = vunpack.c.h.b16 %v1104
    %v1184 = vunpack.c.l.b16 %v1105
    %v1185 = vunpack.c.h.b16 %v1105
    %v1186 = vunpack.c.l.b16 %v1106
    %v1187 = vunpack.c.h.b16 %v1106
    %v1188 = vunpack.c.l.b16 %v1107
    %v1189 = vunpack.c.h.b16 %v1107
    %v1190 = vunpack.c.l.b16 %v1108
    %v1191 = vunpack.c.h.b16 %v1108
    %v1192 = vunpack.c.l.b16 %v1109
    %v1193 = vunpack.c.h.b16 %v1109
    %v1194 = vunpack.c.l.b16 %v1110
    %v1195 = vunpack.c.h.b16 %v1110
    %v1196 = vunpack.c.l.b16 %v1111
    %v1197 = vunpack.c.h.b16 %v1111
    %v1198 = vunpack.c.l.b16 %v1112
    %v1199 = vunpack.c.h.b16 %v1112
    %v1200 = vunpack.c.l.b16 %v1113
    %v1201 = vunpack.c.h.b16 %v1113
    %v1202 = vunpack.c.l.b16 %v1114
    %v1203 = vunpack.c.h.b16 %v1114
    %v1204 = vunpack.c.l.b16 %v1115
    %v1205 = vunpack.c.h.b16 %v1115
    %v1206 = vunpack.c.l.b16 %v1116
    %v1207 = vunpack.c.h.b16 %v1116
    %v1208 = vunpack.c.l.b16 %v1117
    %v1209 = vunpack.c.h.b16 %v1117
    %v1210 = vunpack.c.l.b16 %v1118
    %v1211 = vunpack.c.h.b16 %v1118
    %v1212 = vunpack.c.l.b16 %v1119
    %v1213 = vunpack.c.h.b16 %v1119
    %v1214 = vunpack.c.l.b16 %v1120
    %v1215 = vunpack.c.h.b16 %v1120
    %v1216 = vunpack.c.l.b16 %v1121
    %v1217 = vunpack.c.h.b16 %v1121
    %v1218 = vunpack.c.l.b16 %v1122
    %v1219 = vunpack.c.h.b16 %v1122
    %v1220 = vunpack.c.l.b16 %v1123
    %v1221 = vunpack.c.h.b16 %v1123
    %v1222 = vunpack.c.l.b16 %v1124
    %v1223 = vunpack.c.h.b16 %v1124
    %v1224 = vunpack.c.l.b16 %v1125
    %v1225 = vunpack.c.h.b16 %v1125
    %v1226 = vunpack.c.l.b16 %v1126
    %v1227 = vunpack.c.h.b16 %v1126
    %v1228 = vunpack.c.l.b16 %v1127
    %v1229 = vunpack.c.h.b16 %v1127
    %v1230 = vunpack.c.l.b16 %v1128
    %v1231 = vunpack.c.h.b16 %v1128
    %v1232 = vunpack.c.l.b16 %v1129
    %v1233 = vunpack.c.h.b16 %v1129
    %v1234 = vunpack.c.l.b16 %v1130
    %v1235 = vunpack.c.h.b16 %v1130
    %v1236 = vunpack.c.l.b16 %v1131
    %v1237 = vunpack.c.h.b16 %v1131
    %v1238 = vunpack.c.l.b16 %v1132
    %v1239 = vunpack.c.h.b16 %v1132
    %v1240 = vunpack.c.l.b16 %v1133
    %v1241 = vunpack.c.h.b16 %v1133
    %v1242 = vpack.c.b16 %v1180, %v1178
    %v1243 = vpack.c.b16 %v1181, %v1179
    %v1244 = vpack.c.b16 %v1184, %v1182
    %v1245 = vpack.c.b16 %v1185, %v1183
    %v1246 = vpack.c.b16 %v1188, %v1186
    %v1247 = vpack.c.b16 %v1189, %v1187
    %v1248 = vpack.c.b16 %v1192, %v1190
    %v1249 = vpack.c.b16 %v1193, %v1191
    %v1250 = vpack.c.b16 %v1196, %v1194
    %v1251 = vpack.c.b16 %v1197, %v1195
    %v1252 = vpack.c.b16 %v1200, %v1198
    %v1253 = vpack.c.b16 %v1201, %v1199
    %v1254 = vpack.c.b16 %v1204, %v1202
    %v1255 = vpack.c.b16 %v1205, %v1203
    %v1256 = vpack.c.b16 %v1208, %v1206
    %v1257 = vpack.c.b16 %v1209, %v1207
    %v1258 = vpack.c.b16 %v1212, %v1210
    %v1259 = vpack.c.b16 %v1213, %v1211
    %v1260 = vpack.c.b16 %v1216, %v1214
    %v1261 = vpack.c.b16 %v1217, %v1215
    %v1262 = vpack.c.b16 %v1220, %v1218
    %v1263 = vpack.c.b16 %v1221, %v1219
    %v1264 = vpack.c.b16 %v1224, %v1222
    %v1265 = vpack.c.b16 %v1225, %v1223
    %v1266 = vpack.c.b16 %v1228, %v1226
    %v1267 = vpack.c.b16 %v1229, %v1227
    %v1268 = vpack.c.b16 %v1232, %v1230
    %v1269 = vpack.c.b16 %v1233, %v1231
    %v1270 = vpack.c.b16 %v1236, %v1234
    %v1271 = vpack.c.b16 %v1237, %v1235
    %v1272 = vpack.c.b16 %v1240, %v1238
    %v1273 = vpack.c.b16 %v1241, %v1239
    %1306 = vmatprep.subr.bf16.mxu0 %v1257
    %1307 = vmatpush1.bf16.msra.mxu0 %v1256
    %1308 = vmatprep.subr.bf16.mxu0 %v1255
    %1309 = vmatpush1.bf16.msra.mxu0 %v1254
    %1310 = vmatprep.subr.bf16.mxu0 %v1253
    %1311 = vmatpush1.bf16.msra.mxu0 %v1252
    %1312 = vmatprep.subr.bf16.mxu0 %v1251
    %1313 = vmatpush1.bf16.msra.mxu0 %v1250
    %1314 = vmatprep.subr.bf16.mxu0 %v1249
    %1315 = vmatpush1.bf16.msra.mxu0 %v1248
    %1316 = vmatprep.subr.bf16.mxu0 %v1247
    %1317 = vmatpush1.bf16.msra.mxu0 %v1246
    %1318 = vmatprep.subr.bf16.mxu0 %v1245
    %1319 = vmatpush1.bf16.msra.mxu0 %v1244
    %1320 = vmatprep.subr.bf16.mxu0 %v1243
    %1321 = vmatpush1.bf16.msra.mxu0 %v1242
    %1322 = vmatprep.subr.bf16.mxu0 %v1273
    %1323 = vmatpush2.bf16.msra.mxu0 %v1272
    %1324 = vmatprep.subr.bf16.mxu0 %v1271
    %1325 = vmatpush2.bf16.msra.mxu0 %v1270
    %1326 = vmatprep.subr.bf16.mxu0 %v1269
    %1327 = vmatpush2.bf16.msra.mxu0 %v1268
    %1328 = vmatprep.subr.bf16.mxu0 %v1267
    %1329 = vmatpush2.bf16.msra.mxu0 %v1266
    %1330 = vmatprep.subr.bf16.mxu0 %v1265
    %1331 = vmatpush2.bf16.msra.mxu0 %v1264
    %1332 = vmatprep.subr.bf16.mxu0 %v1263
    %1333 = vmatpush2.bf16.msra.mxu0 %v1262
    %1334 = vmatprep.subr.bf16.mxu0 %v1261
    %1335 = vmatpush2.bf16.msra.mxu0 %v1260
    %1336 = vmatprep.subr.bf16.mxu0 %v1259
    %1337 = vmatpush2.bf16.msra.mxu0 %v1258
    %1338 = vmatprep.mubr.bf16.mxu0 %v1101
    %1339 = vmatmul.mubr.bf16.gmra.mxu0 %v1100
    %v1340 = vpop.f32.mrf.mxu0
    %v1341 = vadd.f32 %v1139, %v1340
    %v1342 = vpop.f32.mrf.mxu0
    %v1343 = vadd.f32 %v1143, %v1342
    %v1344 = vpop.f32.mrf.mxu0
    %v1345 = vpop.f32.mrf.mxu0
    %1346 = vdwg.mxu0
    %v1347 = vpack.c.bf16 %v1341, %v1341
    %v1348 = vpack.c.bf16 %v1343, %v1343
    %v1349 = vmax.bf16 %v1347, 0
    %v1350 = vmax.bf16 %v1348, 0
    %v1351 = vld [vmem:[#allocation8] sm:$0xff]
    %v1352 = vld [vmem:[#allocation8 + $0x8] sm:$0xff]
    %v1353 = vld [vmem:[#allocation8 + $0x10] sm:$0xff]
    %v1354 = vld [vmem:[#allocation8 + $0x18] sm:$0xff]
    %v1355 = vld [vmem:[#allocation8 + $0x20] sm:$0xff]
    %v1356 = vld [vmem:[#allocation8 + $0x28] sm:$0xff]
    %v1357 = vld [vmem:[#allocation8 + $0x30] sm:$0xff]
    %v1358 = vld [vmem:[#allocation8 + $0x38] sm:$0xff]
    %v1359 = vld [vmem:[#allocation8 + $0x40] sm:$0xff]
    %v1360 = vld [vmem:[#allocation8 + $0x48] sm:$0xff]
    %v1361 = vld [vmem:[#allocation8 + $0x50] sm:$0xff]
    %v1362 = vld [vmem:[#allocation8 + $0x58] sm:$0xff]
    %v1363 = vld [vmem:[#allocation8 + $0x60] sm:$0xff]
    %v1364 = vld [vmem:[#allocation8 + $0x68] sm:$0xff]
    %v1365 = vld [vmem:[#allocation8 + $0x70] sm:$0xff]
    %v1366 = vld [vmem:[#allocation8 + $0x78] sm:$0xff]
    %v1367 = vld [vmem:[#allocation8 + $0x80] sm:$0xff]
    %v1368 = vld [vmem:[#allocation8 + $0x88] sm:$0xff]
    %v1369 = vld [vmem:[#allocation8 + $0x90] sm:$0xff]
    %v1370 = vld [vmem:[#allocation8 + $0x98] sm:$0xff]
    %v1371 = vld [vmem:[#allocation8 + $0xa0] sm:$0xff]
    %v1372 = vld [vmem:[#allocation8 + $0xa8] sm:$0xff]
    %v1373 = vld [vmem:[#allocation8 + $0xb0] sm:$0xff]
    %v1374 = vld [vmem:[#allocation8 + $0xb8] sm:$0xff]
    %v1375 = vld [vmem:[#allocation8 + $0xc0] sm:$0xff]
    %v1376 = vld [vmem:[#allocation8 + $0xc8] sm:$0xff]
    %v1377 = vld [vmem:[#allocation8 + $0xd0] sm:$0xff]
    %v1378 = vld [vmem:[#allocation8 + $0xd8] sm:$0xff]
    %v1379 = vld [vmem:[#allocation8 + $0xe0] sm:$0xff]
    %v1380 = vld [vmem:[#allocation8 + $0xe8] sm:$0xff]
    %v1381 = vld [vmem:[#allocation8 + $0xf0] sm:$0xff]
    %v1382 = vld [vmem:[#allocation8 + $0xf8] sm:$0xff]
    %v1383 = vld [vmem:[%s6] sm:$0x3]
    %v1385 = vlaneseq
    %v1386 = vshrl.u32 %v1385, 7
    %v1387 = vsub.s32 0, %v1386
    %v1388 = vrot.slane %v1383, %v1387
    %v1389 = vlaneseq
    %v1390 = vshrl.u32 %v1389, 7
    %v1391 = vsub.s32 1, %v1390
    %v1392 = vrot.slane %v1383, %v1391
    %v1427 = vunpack.c.l.b16 %v1351
    %v1428 = vunpack.c.h.b16 %v1351
    %v1429 = vunpack.c.l.b16 %v1352
    %v1430 = vunpack.c.h.b16 %v1352
    %v1431 = vunpack.c.l.b16 %v1353
    %v1432 = vunpack.c.h.b16 %v1353
    %v1433 = vunpack.c.l.b16 %v1354
    %v1434 = vunpack.c.h.b16 %v1354
    %v1435 = vunpack.c.l.b16 %v1355
    %v1436 = vunpack.c.h.b16 %v1355
    %v1437 = vunpack.c.l.b16 %v1356
    %v1438 = vunpack.c.h.b16 %v1356
    %v1439 = vunpack.c.l.b16 %v1357
    %v1440 = vunpack.c.h.b16 %v1357
    %v1441 = vunpack.c.l.b16 %v1358
    %v1442 = vunpack.c.h.b16 %v1358
    %v1443 = vunpack.c.l.b16 %v1359
    %v1444 = vunpack.c.h.b16 %v1359
    %v1445 = vunpack.c.l.b16 %v1360
    %v1446 = vunpack.c.h.b16 %v1360
    %v1447 = vunpack.c.l.b16 %v1361
    %v1448 = vunpack.c.h.b16 %v1361
    %v1449 = vunpack.c.l.b16 %v1362
    %v1450 = vunpack.c.h.b16 %v1362
    %v1451 = vunpack.c.l.b16 %v1363
    %v1452 = vunpack.c.h.b16 %v1363
    %v1453 = vunpack.c.l.b16 %v1364
    %v1454 = vunpack.c.h.b16 %v1364
    %v1455 = vunpack.c.l.b16 %v1365
    %v1456 = vunpack.c.h.b16 %v1365
    %v1457 = vunpack.c.l.b16 %v1366
    %v1458 = vunpack.c.h.b16 %v1366
    %v1459 = vunpack.c.l.b16 %v1367
    %v1460 = vunpack.c.h.b16 %v1367
    %v1461 = vunpack.c.l.b16 %v1368
    %v1462 = vunpack.c.h.b16 %v1368
    %v1463 = vunpack.c.l.b16 %v1369
    %v1464 = vunpack.c.h.b16 %v1369
    %v1465 = vunpack.c.l.b16 %v1370
    %v1466 = vunpack.c.h.b16 %v1370
    %v1467 = vunpack.c.l.b16 %v1371
    %v1468 = vunpack.c.h.b16 %v1371
    %v1469 = vunpack.c.l.b16 %v1372
    %v1470 = vunpack.c.h.b16 %v1372
    %v1471 = vunpack.c.l.b16 %v1373
    %v1472 = vunpack.c.h.b16 %v1373
    %v1473 = vunpack.c.l.b16 %v1374
    %v1474 = vunpack.c.h.b16 %v1374
    %v1475 = vunpack.c.l.b16 %v1375
    %v1476 = vunpack.c.h.b16 %v1375
    %v1477 = vunpack.c.l.b16 %v1376
    %v1478 = vunpack.c.h.b16 %v1376
    %v1479 = vunpack.c.l.b16 %v1377
    %v1480 = vunpack.c.h.b16 %v1377
    %v1481 = vunpack.c.l.b16 %v1378
    %v1482 = vunpack.c.h.b16 %v1378
    %v1483 = vunpack.c.l.b16 %v1379
    %v1484 = vunpack.c.h.b16 %v1379
    %v1485 = vunpack.c.l.b16 %v1380
    %v1486 = vunpack.c.h.b16 %v1380
    %v1487 = vunpack.c.l.b16 %v1381
    %v1488 = vunpack.c.h.b16 %v1381
    %v1489 = vunpack.c.l.b16 %v1382
    %v1490 = vunpack.c.h.b16 %v1382
    %v1491 = vpack.c.b16 %v1429, %v1427
    %v1492 = vpack.c.b16 %v1430, %v1428
    %v1493 = vpack.c.b16 %v1433, %v1431
    %v1494 = vpack.c.b16 %v1434, %v1432
    %v1495 = vpack.c.b16 %v1437, %v1435
    %v1496 = vpack.c.b16 %v1438, %v1436
    %v1497 = vpack.c.b16 %v1441, %v1439
    %v1498 = vpack.c.b16 %v1442, %v1440
    %v1499 = vpack.c.b16 %v1445, %v1443
    %v1500 = vpack.c.b16 %v1446, %v1444
    %v1501 = vpack.c.b16 %v1449, %v1447
    %v1502 = vpack.c.b16 %v1450, %v1448
    %v1503 = vpack.c.b16 %v1453, %v1451
    %v1504 = vpack.c.b16 %v1454, %v1452
    %v1505 = vpack.c.b16 %v1457, %v1455
    %v1506 = vpack.c.b16 %v1458, %v1456
    %v1507 = vpack.c.b16 %v1461, %v1459
    %v1508 = vpack.c.b16 %v1462, %v1460
    %v1509 = vpack.c.b16 %v1465, %v1463
    %v1510 = vpack.c.b16 %v1466, %v1464
    %v1511 = vpack.c.b16 %v1469, %v1467
    %v1512 = vpack.c.b16 %v1470, %v1468
    %v1513 = vpack.c.b16 %v1473, %v1471
    %v1514 = vpack.c.b16 %v1474, %v1472
    %v1515 = vpack.c.b16 %v1477, %v1475
    %v1516 = vpack.c.b16 %v1478, %v1476
    %v1517 = vpack.c.b16 %v1481, %v1479
    %v1518 = vpack.c.b16 %v1482, %v1480
    %v1519 = vpack.c.b16 %v1485, %v1483
    %v1520 = vpack.c.b16 %v1486, %v1484
    %v1521 = vpack.c.b16 %v1489, %v1487
    %v1522 = vpack.c.b16 %v1490, %v1488
    %1555 = vmatprep.subr.bf16.mxu0 %v1506
    %1556 = vmatpush1.bf16.msra.mxu0 %v1505
    %1557 = vmatprep.subr.bf16.mxu0 %v1504
    %1558 = vmatpush1.bf16.msra.mxu0 %v1503
    %1559 = vmatprep.subr.bf16.mxu0 %v1502
    %1560 = vmatpush1.bf16.msra.mxu0 %v1501
    %1561 = vmatprep.subr.bf16.mxu0 %v1500
    %1562 = vmatpush1.bf16.msra.mxu0 %v1499
    %1563 = vmatprep.subr.bf16.mxu0 %v1498
    %1564 = vmatpush1.bf16.msra.mxu0 %v1497
    %1565 = vmatprep.subr.bf16.mxu0 %v1496
    %1566 = vmatpush1.bf16.msra.mxu0 %v1495
    %1567 = vmatprep.subr.bf16.mxu0 %v1494
    %1568 = vmatpush1.bf16.msra.mxu0 %v1493
    %1569 = vmatprep.subr.bf16.mxu0 %v1492
    %1570 = vmatpush1.bf16.msra.mxu0 %v1491
    %1571 = vmatprep.subr.bf16.mxu0 %v1522
    %1572 = vmatpush2.bf16.msra.mxu0 %v1521
    %1573 = vmatprep.subr.bf16.mxu0 %v1520
    %1574 = vmatpush2.bf16.msra.mxu0 %v1519
    %1575 = vmatprep.subr.bf16.mxu0 %v1518
    %1576 = vmatpush2.bf16.msra.mxu0 %v1517
    %1577 = vmatprep.subr.bf16.mxu0 %v1516
    %1578 = vmatpush2.bf16.msra.mxu0 %v1515
    %1579 = vmatprep.subr.bf16.mxu0 %v1514
    %1580 = vmatpush2.bf16.msra.mxu0 %v1513
    %1581 = vmatprep.subr.bf16.mxu0 %v1512
    %1582 = vmatpush2.bf16.msra.mxu0 %v1511
    %1583 = vmatprep.subr.bf16.mxu0 %v1510
    %1584 = vmatpush2.bf16.msra.mxu0 %v1509
    %1585 = vmatprep.subr.bf16.mxu0 %v1508
    %1586 = vmatpush2.bf16.msra.mxu0 %v1507
    %1587 = vmatprep.mubr.bf16.mxu0 %v1350
    %1588 = vmatmul.mubr.bf16.gmra.mxu0 %v1349
    %v1589 = vpop.f32.mrf.mxu0
    %v1590 = vadd.f32 %v1388, %v1589
    %v1591 = vpop.f32.mrf.mxu0
    %v1592 = vadd.f32 %v1392, %v1591
    %v1593 = vpop.f32.mrf.mxu0
    %v1594 = vpop.f32.mrf.mxu0
    %1595 = vdwg.mxu0
    %v1596 = vpack.c.bf16 %v1590, %v1590
    %v1597 = vpack.c.bf16 %v1592, %v1592
    %v1598 = vmax.bf16 %v1596, 0
    %v1599 = vmax.bf16 %v1597, 0
    %v1600 = vld [vmem:[#allocation10] sm:$0xf]
    %v1601 = vld [vmem:[#allocation10 + $0x4] sm:$0xf]
    %v1602 = vld [vmem:[#allocation10 + $0x8] sm:$0xf]
    %v1603 = vld [vmem:[#allocation10 + $0xc] sm:$0xf]
    %v1604 = vld [vmem:[#allocation10 + $0x10] sm:$0xf]
    %v1605 = vld [vmem:[#allocation10 + $0x14] sm:$0xf]
    %v1606 = vld [vmem:[#allocation10 + $0x18] sm:$0xf]
    %v1607 = vld [vmem:[#allocation10 + $0x1c] sm:$0xf]
    %v1608 = vld [vmem:[#allocation10 + $0x20] sm:$0xf]
    %v1609 = vld [vmem:[#allocation10 + $0x24] sm:$0xf]
    %v1610 = vld [vmem:[#allocation10 + $0x28] sm:$0xf]
    %v1611 = vld [vmem:[#allocation10 + $0x2c] sm:$0xf]
    %v1612 = vld [vmem:[#allocation10 + $0x30] sm:$0xf]
    %v1613 = vld [vmem:[#allocation10 + $0x34] sm:$0xf]
    %v1614 = vld [vmem:[#allocation10 + $0x38] sm:$0xf]
    %v1615 = vld [vmem:[#allocation10 + $0x3c] sm:$0xf]
    %v1616 = vld [vmem:[#allocation10 + $0x40] sm:$0xf]
    %v1617 = vld [vmem:[#allocation10 + $0x44] sm:$0xf]
    %v1618 = vld [vmem:[#allocation10 + $0x48] sm:$0xf]
    %v1619 = vld [vmem:[#allocation10 + $0x4c] sm:$0xf]
    %v1620 = vld [vmem:[#allocation10 + $0x50] sm:$0xf]
    %v1621 = vld [vmem:[#allocation10 + $0x54] sm:$0xf]
    %v1622 = vld [vmem:[#allocation10 + $0x58] sm:$0xf]
    %v1623 = vld [vmem:[#allocation10 + $0x5c] sm:$0xf]
    %v1624 = vld [vmem:[#allocation10 + $0x60] sm:$0xf]
    %v1625 = vld [vmem:[#allocation10 + $0x64] sm:$0xf]
    %v1626 = vld [vmem:[#allocation10 + $0x68] sm:$0xf]
    %v1627 = vld [vmem:[#allocation10 + $0x6c] sm:$0xf]
    %v1628 = vld [vmem:[#allocation10 + $0x70] sm:$0xf]
    %v1629 = vld [vmem:[#allocation10 + $0x74] sm:$0xf]
    %v1630 = vld [vmem:[#allocation10 + $0x78] sm:$0xf]
    %v1631 = vld [vmem:[#allocation10 + $0x7c] sm:$0xf]
    %v1632 = vld [vmem:[%s8] sm:$0x1]
    %v1634 = vlaneseq
    %v1635 = vshrl.u32 %v1634, 7
    %v1636 = vsub.s32 0, %v1635
    %v1637 = vrot.slane %v1632, %v1636
    %v1671 = vunpack.c.l.b16 %v1600
    %v1672 = vunpack.c.l.b16 %v1601
    %v1673 = vunpack.c.l.b16 %v1602
    %v1674 = vunpack.c.l.b16 %v1603
    %v1675 = vunpack.c.l.b16 %v1604
    %v1676 = vunpack.c.l.b16 %v1605
    %v1677 = vunpack.c.l.b16 %v1606
    %v1678 = vunpack.c.l.b16 %v1607
    %v1679 = vunpack.c.l.b16 %v1608
    %v1680 = vunpack.c.l.b16 %v1609
    %v1681 = vunpack.c.l.b16 %v1610
    %v1682 = vunpack.c.l.b16 %v1611
    %v1683 = vunpack.c.l.b16 %v1612
    %v1684 = vunpack.c.l.b16 %v1613
    %v1685 = vunpack.c.l.b16 %v1614
    %v1686 = vunpack.c.l.b16 %v1615
    %v1687 = vunpack.c.l.b16 %v1616
    %v1688 = vunpack.c.l.b16 %v1617
    %v1689 = vunpack.c.l.b16 %v1618
    %v1690 = vunpack.c.l.b16 %v1619
    %v1691 = vunpack.c.l.b16 %v1620
    %v1692 = vunpack.c.l.b16 %v1621
    %v1693 = vunpack.c.l.b16 %v1622
    %v1694 = vunpack.c.l.b16 %v1623
    %v1695 = vunpack.c.l.b16 %v1624
    %v1696 = vunpack.c.l.b16 %v1625
    %v1697 = vunpack.c.l.b16 %v1626
    %v1698 = vunpack.c.l.b16 %v1627
    %v1699 = vunpack.c.l.b16 %v1628
    %v1700 = vunpack.c.l.b16 %v1629
    %v1701 = vunpack.c.l.b16 %v1630
    %v1702 = vunpack.c.l.b16 %v1631
    %v1703 = vpack.c.b16 %v1672, %v1671
    %v1704 = vpack.c.b16 %v1674, %v1673
    %v1705 = vpack.c.b16 %v1676, %v1675
    %v1706 = vpack.c.b16 %v1678, %v1677
    %v1707 = vpack.c.b16 %v1680, %v1679
    %v1708 = vpack.c.b16 %v1682, %v1681
    %v1709 = vpack.c.b16 %v1684, %v1683
    %v1710 = vpack.c.b16 %v1686, %v1685
    %v1711 = vpack.c.b16 %v1688, %v1687
    %v1712 = vpack.c.b16 %v1690, %v1689
    %v1713 = vpack.c.b16 %v1692, %v1691
    %v1714 = vpack.c.b16 %v1694, %v1693
    %v1715 = vpack.c.b16 %v1696, %v1695
    %v1716 = vpack.c.b16 %v1698, %v1697
    %v1717 = vpack.c.b16 %v1700, %v1699
    %v1718 = vpack.c.b16 %v1702, %v1701
    %1735 = vmatprep.subr.bf16.mxu0 0
    %1736 = vmatpush1.bf16.msra.mxu0 %v1710
    %1737 = vmatprep.subr.bf16.mxu0 0
    %1738 = vmatpush1.bf16.msra.mxu0 %v1709
    %1739 = vmatprep.subr.bf16.mxu0 0
    %1740 = vmatpush1.bf16.msra.mxu0 %v1708
    %1741 = vmatprep.subr.bf16.mxu0 0
    %1742 = vmatpush1.bf16.msra.mxu0 %v1707
    %1743 = vmatprep.subr.bf16.mxu0 0
    %1744 = vmatpush1.bf16.msra.mxu0 %v1706
    %1745 = vmatprep.subr.bf16.mxu0 0
    %1746 = vmatpush1.bf16.msra.mxu0 %v1705
    %1747 = vmatprep.subr.bf16.mxu0 0
    %1748 = vmatpush1.bf16.msra.mxu0 %v1704
    %1749 = vmatprep.subr.bf16.mxu0 0
    %1750 = vmatpush1.bf16.msra.mxu0 %v1703
    %1751 = vmatprep.subr.bf16.mxu0 0
    %1752 = vmatpush2.bf16.msra.mxu0 %v1718
    %1753 = vmatprep.subr.bf16.mxu0 0
    %1754 = vmatpush2.bf16.msra.mxu0 %v1717
    %1755 = vmatprep.subr.bf16.mxu0 0
    %1756 = vmatpush2.bf16.msra.mxu0 %v1716
    %1757 = vmatprep.subr.bf16.mxu0 0
    %1758 = vmatpush2.bf16.msra.mxu0 %v1715
    %1759 = vmatprep.subr.bf16.mxu0 0
    %1760 = vmatpush2.bf16.msra.mxu0 %v1714
    %1761 = vmatprep.subr.bf16.mxu0 0
    %1762 = vmatpush2.bf16.msra.mxu0 %v1713
    %1763 = vmatprep.subr.bf16.mxu0 0
    %1764 = vmatpush2.bf16.msra.mxu0 %v1712
    %1765 = vmatprep.subr.bf16.mxu0 0
    %1766 = vmatpush2.bf16.msra.mxu0 %v1711
    %1767 = vmatprep.mubr.bf16.mxu0 %v1599
    %1768 = vmatmul.mubr.bf16.gmra.mxu0 %v1598
    %v1769 = vpop.f32.mrf.mxu0
    %v1770 = vadd.f32 %v1637, %v1769
    %v1771 = vpop.f32.mrf.mxu0
    %v1772 = vpop.f32.mrf.mxu0
    %v1773 = vpop.f32.mrf.mxu0
    %1774 = vdwg.mxu0
    %1775 = vst [vmem:[#allocation11] sm:$0x3] %v1770
    // Predicated region
    $region58: #{tpu_custom_call.1} parent=1 // pred_check
      _
    $region59: #{tpu_custom_call.1} parent=1 // pred_check_branch
      %1777 = sbr.rel (0) target = $region61
    $region60: #{tpu_custom_call.1} parent=1 // pred_region
      %s1779 = ssub.s32 32, 32
      %1780 = vsyncadd [#allocation4], %s1779
      %s1782 = sshll.u32 [#allocation11], 4
      %s1783 = int_to_ptr.vmem [resolvable:$true] %s1782
      %1785 = dma.vmem_to_hbm [thread:$0]  %s1783, 32, %s9, [#allocation4]
    $region61: #{tpu_custom_call.1} parent=1 // pred_fallthru
      _
    // Predicated region
    $region62: #{tpu_custom_call.1} parent=1 // pred_check
      _
    $region63: #{tpu_custom_call.1} parent=1 // pred_check_branch
      %1787 = sbr.rel (0) target = $region65
    $region64: #{tpu_custom_call.1} parent=1 // pred_region
      %1788 = dma.done [#allocation4], 32
    $region65: #{tpu_custom_call.1} parent=1 // pred_fallthru
      _
    %1789 = vsyncpa [#allocation3], 1
    %1790 = vsyncpa [#allocation6], 1
    %1791 = vsyncpa [#allocation9], 1
    %1792 = vsyncpa [#allocation4], 1

</llo_original>
